<compile_context>
chip_gen: v7x
topology: tpu7x:2x2x1
jax: 0.10.0
libtpu: 0.0.40
codegen_flags: <defaults>
</compile_context>

<pallas_src>
import functools

import jax
import jax.numpy as jnp
from jax.experimental import pallas as pl
from jax.experimental.pallas import tpu as pltpu

H1 = 256   # hidden width of first Linear
H2 = 128   # hidden width of second Linear


# --------------------------------------------------------------------------- #
# Kernel
# --------------------------------------------------------------------------- #
def _one_push_sigmoid(z_f32, act_dtype):
    """sigmoid(z) == 0.5*tanh(z/2) + 0.5: a single EUP push (tanh) instead of
    exp + reciprocal.  Computed in `act_dtype` (bf16 on v6e/v7x, f32 on v5e)."""
    t = jnp.tanh((z_f32 * 0.5).astype(act_dtype))
    half = jnp.asarray(0.5, act_dtype)
    return t * half + half


def _make_kernel(act_dtype):
    def gap_kernel(x_ref, w1_ref, b1_ref, w2_ref, b2_ref, w3_ref, b3_ref, out_ref):
        wdt = w1_ref.dtype                       # MXU input dtype (bf16 by default)

        x = x_ref[...].astype(wdt)               # (tile_b, x_dim)

        # Linear(x_dim, 256) + sigmoid            (f32 accumulate on the MXU)
        z1 = jnp.dot(x, w1_ref[...], preferred_element_type=jnp.float32) + b1_ref[...]
        h1 = _one_push_sigmoid(z1, act_dtype)

        # Linear(256, 128) + sigmoid
        z2 = jnp.dot(h1.astype(wdt), w2_ref[...],
                     preferred_element_type=jnp.float32) + b2_ref[...]
        h2 = _one_push_sigmoid(z2, act_dtype)

        # Linear(128, 1): degenerate-N matmul replaced by VPU multiply +
        # cross-lane (XLU) reduction; both slots are otherwise idle here.
        w3_row = w3_ref[...].astype(jnp.float32)                   # (1, H2)
        sigma = jnp.sum(h2.astype(jnp.float32) * w3_row,
                        axis=-1, keepdims=True) + b3_ref[...]      # (tile_b, 1)
        out_ref[...] = sigma.astype(out_ref.dtype)

    return gap_kernel


# --------------------------------------------------------------------------- #
# Per-chip planning
# --------------------------------------------------------------------------- #
@functools.lru_cache(maxsize=1)
def _chip_plan():
    kind = ""
    try:
        kind = jax.devices()[0].device_kind.lower()
    except Exception:
        pass
    if "v7" in kind:
        # 64 MiB physical VMEM (32 MiB scoped default), 2 TensorCores, bf16 EUP.
        return {"budget": 16 << 20, "vmem_limit": 40 << 20,
                "two_cores": True, "bf16_act": True}
    if "v6" in kind:
        # 128 MiB physical (32 MiB scoped default), 1 TensorCore, bf16 EUP.
        return {"budget": 24 << 20, "vmem_limit": 64 << 20,
                "two_cores": False, "bf16_act": True}
    if "v5" in kind or "v4" in kind:
        # 128 MiB physical (16 MiB scoped default on v5e), 1 TC, no bf16 EUP/VPU.
        return {"budget": 24 << 20, "vmem_limit": 64 << 20,
                "two_cores": False, "bf16_act": False}
    # Unknown chip: stay within the smallest scoped-VMEM default (16 MiB).
    return {"budget": 6 << 20, "vmem_limit": None,
            "two_cores": False, "bf16_act": False}


def _plan_batch(B, x_dim_p, x_itemsize, act_bytes, budget_bytes, weight_bytes,
                two_cores, max_tile=8192):
    """Pick (tile_b, num_tiles) so the per-step working set fits the VMEM budget.
    tile_b is a multiple of 128 (lane-aligned); the caller zero-pads the batch
    up to tile_b * num_tiles."""
    per_row = (
        2 * x_dim_p * x_itemsize      # x block, double-buffered by the pipeline
        + x_dim_p * act_bytes         # in-kernel cast copy of x
        + H1 * (4 + act_bytes)        # layer-1 pre-activation (f32) + activation
        + H2 * (4 + act_bytes)        # layer-2 pre-activation (f32) + activation
        + H2 * 4                      # layer-3 elementwise product (f32)
        + 2 * 4                       # output block, double-buffered f32
    )
    avail = budget_bytes - 2 * weight_bytes    # weights counted twice as margin
    cap = min(max_tile, max(128, avail // per_row))
    cap -= cap % 128
    cap = max(cap, 128)

    num_tiles = -(-B // cap)
    if two_cores:
        # v7x has 2 TensorCores: split the "parallel" batch axis evenly.
        if num_tiles == 1 and B > 256:
            num_tiles = 2
        elif num_tiles > 1 and num_tiles % 2 == 1:
            num_tiles += 1
    rows = -(-B // num_tiles)
    tile_b = -(-rows // 128) * 128
    return tile_b, num_tiles


# --------------------------------------------------------------------------- #
# Wrapper
# --------------------------------------------------------------------------- #
def gap_estimation_forward(x, params, *, weights_dtype=jnp.bfloat16):
    """x: (B, x_dim) float32 or bfloat16.  Returns sigma: (B, 1) float32.

    params = (w1, b1, w2, b2, w3, b3) with
      w1: (x_dim, 256), b1: (256,), w2: (256, 128), b2: (128,),
      w3: (128, 1) or (1, 128), b3: (1,)
    (PyTorch nn.Linear weights are (out, in); transpose them into this layout.)

    NOTE: weights_dtype=bf16 is an intentional deviation from the fp32 module
    (f32 accumulation is kept); pass weights_dtype=jnp.float32 for full fidelity.
    """
    B, x_dim = x.shape
    w1, b1, w2, b2, w3, b3 = params
    assert w1.shape == (x_dim, H1)
    assert w2.shape == (H1, H2)
    assert w3.shape in ((H2, 1), (1, H2))

    plan = _chip_plan()
    use_bf16_act = plan["bf16_act"] and weights_dtype == jnp.bfloat16
    act_dtype = jnp.bfloat16 if use_bf16_act else jnp.float32

    # Pad the feature dim to a multiple of 128 only when it is large and
    # unaligned (zero cols of x / zero rows of w1 contribute nothing).
    x_dim_p = x_dim
    if x_dim > 128 and x_dim % 128 != 0:
        x_dim_p = ((x_dim + 127) // 128) * 128
        x = jnp.pad(x, ((0, 0), (0, x_dim_p - x_dim)))
        w1 = jnp.pad(w1, ((0, x_dim_p - x_dim), (0, 0)))

    # bf16 weights halve the (one-off) weight DMA and feed the MXU natively;
    # all matmuls still accumulate in f32.  Biases stay f32.
    w1 = w1.astype(weights_dtype)
    w2 = w2.astype(weights_dtype)
    w3 = jnp.reshape(w3, (1, H2)).astype(weights_dtype)
    b1 = jnp.reshape(b1, (1, H1)).astype(jnp.float32)
    b2 = jnp.reshape(b2, (1, H2)).astype(jnp.float32)
    b3 = jnp.reshape(b3, (1, 1)).astype(jnp.float32)

    weight_bytes = ((x_dim_p * H1 + H1 * H2 + H2) * jnp.dtype(weights_dtype).itemsize
                    + (H1 + H2 + 1) * 4)
    tile_b, num_tiles = _plan_batch(
        B, x_dim_p, x.dtype.itemsize, jnp.dtype(act_dtype).itemsize,
        plan["budget"], weight_bytes, plan["two_cores"])

    B_pad = tile_b * num_tiles
    if B_pad != B:
        x = jnp.pad(x, ((0, B_pad - B), (0, 0)))   # zero rows; sliced off below

    rep2 = lambda i: (0, 0)   # grid-invariant blocks: DMA'd once by the pipeline

    def run(single_buffer_weights):
        # Single-buffer the never-refetched weights/biases to reclaim VMEM.
        mode = {"pipeline_mode": pl.Buffered(1)} if single_buffer_weights else {}
        in_specs = [
            pl.BlockSpec((tile_b, x_dim_p), lambda i: (i, 0)),        # x
            pl.BlockSpec((x_dim_p, H1), rep2, **mode),                # w1
            pl.BlockSpec((1, H1), rep2, **mode),                      # b1
            pl.BlockSpec((H1, H2), rep2, **mode),                     # w2
            pl.BlockSpec((1, H2), rep2, **mode),                      # b2
            pl.BlockSpec((1, H2), rep2, **mode),                      # w3 (row)
            pl.BlockSpec((1, 1), rep2, **mode),                       # b3
        ]
        return pl.pallas_call(
            _make_kernel(act_dtype),
            out_shape=jax.ShapeDtypeStruct((B_pad, 1), jnp.float32),
            grid_spec=pltpu.PrefetchScalarGridSpec(
                num_scalar_prefetch=0,
                grid=(num_tiles,),
                in_specs=in_specs,
                out_specs=pl.BlockSpec((tile_b, 1), lambda i: (i, 0)),
            ),
            compiler_params=pltpu.CompilerParams(
                dimension_semantics=("parallel",),
                vmem_limit_bytes=plan["vmem_limit"],
            ),
        )(x, w1, b1, w2, b2, w3, b3)

    try:
        sigma = run(single_buffer_weights=True)
    except Exception:
        # Defensive fallback if this build rejects pl.Buffered(1) weight blocks.
        sigma = run(single_buffer_weights=False)

    return sigma[:B]


# --------------------------------------------------------------------------- #
# Parameters / reference
# --------------------------------------------------------------------------- #
def init_params(key, x_dim):
    """Synthetic parameters with torch's default Linear init (uniform +-1/sqrt(fan_in)).
    Weights are [in, out] (transpose of torch's [out, in])."""
    ks = jax.random.split(key, 6)

    def lin(kw, kb, fan_in, fan_out):
        bound = 1.0 / jnp.sqrt(fan_in)
        w = jax.random.uniform(kw, (fan_in, fan_out), jnp.float32, -bound, bound)
        b = jax.random.uniform(kb, (fan_out,), jnp.float32, -bound, bound)
        return w, b

    w1, b1 = lin(ks[0], ks[1], x_dim, H1)
    w2, b2 = lin(ks[2], ks[3], H1, H2)
    w3, b3 = lin(ks[4], ks[5], H2, 1)
    return (w1, b1, w2, b2, w3, b3)


def reference_forward(x, params, *, weights_dtype=jnp.bfloat16, act_dtype=jnp.float32):
    """Pure-JAX reference using the same numeric recipe as the kernel
    (low-precision weights, f32 accumulation, tanh-form sigmoid in act_dtype)."""
    w1, b1, w2, b2, w3, b3 = params

    def sig(z):
        t = jnp.tanh((z * 0.5).astype(act_dtype))
        half = jnp.asarray(0.5, act_dtype)
        return t * half + half

    def lin(h, w, b):
        return (jnp.dot(h.astype(weights_dtype), w.astype(weights_dtype),
                        preferred_element_type=jnp.float32)
                + jnp.reshape(b, (1, -1)).astype(jnp.float32))

    h1 = sig(lin(x, w1, b1))
    h2 = sig(lin(h1, w2, b2))
    w3_row = jnp.reshape(w3, (1, H2)).astype(weights_dtype).astype(jnp.float32)
    return (jnp.sum(h2.astype(jnp.float32) * w3_row, axis=-1, keepdims=True)
            + jnp.reshape(b3, (1, 1)).astype(jnp.float32))


# --------------------------------------------------------------------------- #
# Self-test
# --------------------------------------------------------------------------- #
if __name__ == "__main__":
    key = jax.random.PRNGKey(0)
    k_x, k_p, k_x2 = jax.random.split(key, 3)

    x_dim = 32
    params = init_params(k_p, x_dim)
    plan = _chip_plan()
    act_dtype = jnp.bfloat16 if plan["bf16_act"] else jnp.float32

    # Small batch: single tile after padding.
    B = 64
    x = jax.random.normal(k_x, (B, x_dim), dtype=jnp.float32)
    sigma = gap_estimation_forward(x, params)
    jax.block_until_ready(sigma)
    assert sigma.shape == (B, 1)
    sigma_ref = reference_forward(x, params, act_dtype=act_dtype)
    assert jnp.allclose(sigma, sigma_ref, atol=2e-3, rtol=2e-3), (
        float(jnp.max(jnp.abs(sigma - sigma_ref))))

    # Ragged larger batch: exercises batch padding and (chip-dependent) multi-tile grid.
    B2 = 4000
    x2 = jax.random.normal(k_x2, (B2, x_dim), dtype=jnp.float32)
    sigma2 = gap_estimation_forward(x2, params)
    jax.block_until_ready(sigma2)
    assert sigma2.shape == (B2, 1)
    sigma2_ref = reference_forward(x2, params, act_dtype=act_dtype)
    assert jnp.allclose(sigma2, sigma2_ref, atol=2e-3, rtol=2e-3), (
        float(jnp.max(jnp.abs(sigma2 - sigma2_ref))))

    print("KERNEL_OK")
</pallas_src>

<mosaic_0001>
module attributes {stable_mosaic.version = 11 : i64} {
  func.func @gap_kernel(%arg0: i32, %arg1: memref<128x32xf32, #tpu.memory_space<vmem>>, %arg2: memref<32x256xbf16, #tpu.memory_space<vmem>>, %arg3: memref<1x256xf32, #tpu.memory_space<vmem>>, %arg4: memref<256x128xbf16, #tpu.memory_space<vmem>>, %arg5: memref<1x128xf32, #tpu.memory_space<vmem>>, %arg6: memref<1x128xbf16, #tpu.memory_space<vmem>>, %arg7: memref<1x1xf32, #tpu.memory_space<vmem>>, %arg8: memref<128x1xf32, #tpu.memory_space<vmem>>) attributes {dimension_semantics = [#tpu.dimension_semantics<parallel>], iteration_bounds = array<i64: 1>, scalar_prefetch = 0 : i64, scratch_operands = 0 : i64, tpu.core_type = #tpu.core_type<tc>, window_params = [{transform_indices = @transform_0, window_bounds = array<i64: 128, 32>}, {pipeline_mode = #tpu.pipeline_mode<synchronous>, transform_indices = @transform_1, window_bounds = array<i64: 32, 256>}, {pipeline_mode = #tpu.pipeline_mode<synchronous>, transform_indices = @transform_2, window_bounds = array<i64: 1, 256>}, {pipeline_mode = #tpu.pipeline_mode<synchronous>, transform_indices = @transform_3, window_bounds = array<i64: 256, 128>}, {pipeline_mode = #tpu.pipeline_mode<synchronous>, transform_indices = @transform_4, window_bounds = array<i64: 1, 128>}, {pipeline_mode = #tpu.pipeline_mode<synchronous>, transform_indices = @transform_5, window_bounds = array<i64: 1, 128>}, {pipeline_mode = #tpu.pipeline_mode<synchronous>, transform_indices = @transform_6, window_bounds = array<i64: 1, 1>}, {transform_indices = @transform_7, window_bounds = array<i64: 128, 1>}]} {
    %c0 = arith.constant 0 : index
    %c0_0 = arith.constant 0 : index
    %0 = vector.load %arg1[%c0, %c0_0] : memref<128x32xf32, #tpu.memory_space<vmem>>, vector<128x32xf32>
    %1 = arith.truncf %0 : vector<128x32xf32> to vector<128x32xbf16>
    %c0_1 = arith.constant 0 : index
    %c0_2 = arith.constant 0 : index
    %2 = vector.load %arg2[%c0_1, %c0_2] : memref<32x256xbf16, #tpu.memory_space<vmem>>, vector<32x256xbf16>
    %cst = arith.constant dense<0.000000e+00> : vector<128x256xf32>
    %3 = tpu.matmul %1, %2, %cst {dimension_numbers = #tpu.dot_dimension_numbers<[1], [0], [0], [1], [0, 0, 1, 1], [], []>} : vector<128x32xbf16>, vector<32x256xbf16>, vector<128x256xf32> -> vector<128x256xf32>
    %c0_3 = arith.constant 0 : index
    %c0_4 = arith.constant 0 : index
    %4 = vector.load %arg3[%c0_3, %c0_4] : memref<1x256xf32, #tpu.memory_space<vmem>>, vector<1x256xf32>
    %5 = vector.broadcast %4 : vector<1x256xf32> to vector<128x256xf32>
    %6 = arith.addf %3, %5 : vector<128x256xf32>
    %cst_5 = arith.constant 5.000000e-01 : f32
    %7 = vector.broadcast %cst_5 : f32 to vector<128x256xf32>
    %8 = arith.mulf %6, %7 : vector<128x256xf32>
    %9 = math.tanh %8 : vector<128x256xf32>
    %cst_6 = arith.constant 5.000000e-01 : f32
    %10 = vector.broadcast %cst_6 : f32 to vector<128x256xf32>
    %11 = arith.mulf %9, %10 : vector<128x256xf32>
    %cst_7 = arith.constant 5.000000e-01 : f32
    %12 = vector.broadcast %cst_7 : f32 to vector<128x256xf32>
    %13 = arith.addf %11, %12 : vector<128x256xf32>
    %14 = arith.truncf %13 : vector<128x256xf32> to vector<128x256xbf16>
    %c0_8 = arith.constant 0 : index
    %c0_9 = arith.constant 0 : index
    %15 = vector.load %arg4[%c0_8, %c0_9] : memref<256x128xbf16, #tpu.memory_space<vmem>>, vector<256x128xbf16>
    %cst_10 = arith.constant dense<0.000000e+00> : vector<128x128xf32>
    %16 = tpu.matmul %14, %15, %cst_10 {dimension_numbers = #tpu.dot_dimension_numbers<[1], [0], [0], [1], [0, 0, 1, 1], [], []>} : vector<128x256xbf16>, vector<256x128xbf16>, vector<128x128xf32> -> vector<128x128xf32>
    %c0_11 = arith.constant 0 : index
    %c0_12 = arith.constant 0 : index
    %17 = vector.load %arg5[%c0_11, %c0_12] : memref<1x128xf32, #tpu.memory_space<vmem>>, vector<1x128xf32>
    %18 = vector.broadcast %17 : vector<1x128xf32> to vector<128x128xf32>
    %19 = arith.addf %16, %18 : vector<128x128xf32>
    %cst_13 = arith.constant 5.000000e-01 : f32
    %20 = vector.broadcast %cst_13 : f32 to vector<128x128xf32>
    %21 = arith.mulf %19, %20 : vector<128x128xf32>
    %22 = math.tanh %21 : vector<128x128xf32>
    %cst_14 = arith.constant 5.000000e-01 : f32
    %23 = vector.broadcast %cst_14 : f32 to vector<128x128xf32>
    %24 = arith.mulf %22, %23 : vector<128x128xf32>
    %cst_15 = arith.constant 5.000000e-01 : f32
    %25 = vector.broadcast %cst_15 : f32 to vector<128x128xf32>
    %26 = arith.addf %24, %25 : vector<128x128xf32>
    %c0_16 = arith.constant 0 : index
    %c0_17 = arith.constant 0 : index
    %27 = vector.load %arg6[%c0_16, %c0_17] : memref<1x128xbf16, #tpu.memory_space<vmem>>, vector<1x128xbf16>
    %28 = arith.extf %27 : vector<1x128xbf16> to vector<1x128xf32>
    %29 = vector.broadcast %28 : vector<1x128xf32> to vector<128x128xf32>
    %30 = arith.mulf %26, %29 : vector<128x128xf32>
    %cst_18 = arith.constant dense<0.000000e+00> : vector<128xf32>
    %31 = vector.multi_reduction <add>, %30, %cst_18 [1] : vector<128x128xf32> to vector<128xf32>
    %32 = vector.shape_cast %31 : vector<128xf32> to vector<128x1xf32>
    %c0_19 = arith.constant 0 : index
    %c0_20 = arith.constant 0 : index
    %33 = vector.load %arg7[%c0_19, %c0_20] : memref<1x1xf32, #tpu.memory_space<vmem>>, vector<1x1xf32>
    %34 = vector.broadcast %33 : vector<1x1xf32> to vector<128x1xf32>
    %35 = arith.addf %32, %34 : vector<128x1xf32>
    %c0_21 = arith.constant 0 : index
    %c0_22 = arith.constant 0 : index
    %36 = vector.load %arg8[%c0_21, %c0_22] : memref<128x1xf32, #tpu.memory_space<vmem>>, vector<128x1xf32>
    tpu.vector_store %arg8[%c0_21, %c0_22], %35 {strides = array<i32>} : memref<128x1xf32, #tpu.memory_space<vmem>>, vector<128x1xf32>,
    return
  }
  func.func @transform_0(%arg0: i32) -> (i32, i32) {
    %c0_i32 = arith.constant 0 : i32
    %c0_i32_0 = arith.constant 0 : i32
    return %arg0, %c0_i32 : i32, i32
  }
  func.func @transform_1(%arg0: i32) -> (i32, i32) {
    %c0_i32 = arith.constant 0 : i32
    %c0_i32_0 = arith.constant 0 : i32
    %c0_i32_1 = arith.constant 0 : i32
    return %c0_i32, %c0_i32_0 : i32, i32
  }
  func.func @transform_2(%arg0: i32) -> (i32, i32) {
    %c0_i32 = arith.constant 0 : i32
    %c0_i32_0 = arith.constant 0 : i32
    %c0_i32_1 = arith.constant 0 : i32
    return %c0_i32, %c0_i32_0 : i32, i32
  }
  func.func @transform_3(%arg0: i32) -> (i32, i32) {
    %c0_i32 = arith.constant 0 : i32
    %c0_i32_0 = arith.constant 0 : i32
    %c0_i32_1 = arith.constant 0 : i32
    return %c0_i32, %c0_i32_0 : i32, i32
  }
  func.func @transform_4(%arg0: i32) -> (i32, i32) {
    %c0_i32 = arith.constant 0 : i32
    %c0_i32_0 = arith.constant 0 : i32
    %c0_i32_1 = arith.constant 0 : i32
    return %c0_i32, %c0_i32_0 : i32, i32
  }
  func.func @transform_5(%arg0: i32) -> (i32, i32) {
    %c0_i32 = arith.constant 0 : i32
    %c0_i32_0 = arith.constant 0 : i32
    %c0_i32_1 = arith.constant 0 : i32
    return %c0_i32, %c0_i32_0 : i32, i32
  }
  func.func @transform_6(%arg0: i32) -> (i32, i32) {
    %c0_i32 = arith.constant 0 : i32
    %c0_i32_0 = arith.constant 0 : i32
    %c0_i32_1 = arith.constant 0 : i32
    return %c0_i32, %c0_i32_0 : i32, i32
  }
  func.func @transform_7(%arg0: i32) -> (i32, i32) {
    %c0_i32 = arith.constant 0 : i32
    %c0_i32_0 = arith.constant 0 : i32
    return %arg0, %c0_i32 : i32, i32
  }
}

module attributes {stable_mosaic.version = 11 : i64} {
  func.func @gap_kernel(%arg0: i32, %arg1: memref<128x32xf32, #tpu.memory_space<vmem>>, %arg2: memref<32x256xbf16, #tpu.memory_space<vmem>>, %arg3: memref<1x256xf32, #tpu.memory_space<vmem>>, %arg4: memref<256x128xbf16, #tpu.memory_space<vmem>>, %arg5: memref<1x128xf32, #tpu.memory_space<vmem>>, %arg6: memref<1x128xbf16, #tpu.memory_space<vmem>>, %arg7: memref<1x1xf32, #tpu.memory_space<vmem>>, %arg8: memref<128x1xf32, #tpu.memory_space<vmem>>) attributes {dimension_semantics = [#tpu.dimension_semantics<parallel>], iteration_bounds = array<i64: 1>, scalar_prefetch = 0 : i64, scratch_operands = 0 : i64, tpu.core_type = #tpu.core_type<tc>, window_params = [{transform_indices = @transform_0, window_bounds = array<i64: 128, 32>}, {pipeline_mode = #tpu.pipeline_mode<synchronous>, transform_indices = @transform_1, window_bounds = array<i64: 32, 256>}, {pipeline_mode = #tpu.pipeline_mode<synchronous>, transform_indices = @transform_2, window_bounds = array<i64: 1, 256>}, {pipeline_mode = #tpu.pipeline_mode<synchronous>, transform_indices = @transform_3, window_bounds = array<i64: 256, 128>}, {pipeline_mode = #tpu.pipeline_mode<synchronous>, transform_indices = @transform_4, window_bounds = array<i64: 1, 128>}, {pipeline_mode = #tpu.pipeline_mode<synchronous>, transform_indices = @transform_5, window_bounds = array<i64: 1, 128>}, {pipeline_mode = #tpu.pipeline_mode<synchronous>, transform_indices = @transform_6, window_bounds = array<i64: 1, 1>}, {transform_indices = @transform_7, window_bounds = array<i64: 128, 1>}]} {
    %c0 = arith.constant 0 : index
    %c0_0 = arith.constant 0 : index
    %0 = vector.load %arg1[%c0, %c0_0] : memref<128x32xf32, #tpu.memory_space<vmem>>, vector<128x32xf32>
    %1 = arith.truncf %0 : vector<128x32xf32> to vector<128x32xbf16>
    %c0_1 = arith.constant 0 : index
    %c0_2 = arith.constant 0 : index
    %2 = vector.load %arg2[%c0_1, %c0_2] : memref<32x256xbf16, #tpu.memory_space<vmem>>, vector<32x256xbf16>
    %cst = arith.constant dense<0.000000e+00> : vector<128x256xf32>
    %3 = tpu.matmul %1, %2, %cst {dimension_numbers = #tpu.dot_dimension_numbers<[1], [0], [0], [1], [0, 0, 1, 1], [], []>} : vector<128x32xbf16>, vector<32x256xbf16>, vector<128x256xf32> -> vector<128x256xf32>
    %c0_3 = arith.constant 0 : index
    %c0_4 = arith.constant 0 : index
    %4 = vector.load %arg3[%c0_3, %c0_4] : memref<1x256xf32, #tpu.memory_space<vmem>>, vector<1x256xf32>
    %5 = vector.broadcast %4 : vector<1x256xf32> to vector<128x256xf32>
    %6 = arith.addf %3, %5 : vector<128x256xf32>
    %cst_5 = arith.constant 5.000000e-01 : f32
    %7 = vector.broadcast %cst_5 : f32 to vector<128x256xf32>
    %8 = arith.mulf %6, %7 : vector<128x256xf32>
    %9 = math.tanh %8 : vector<128x256xf32>
    %cst_6 = arith.constant 5.000000e-01 : f32
    %10 = vector.broadcast %cst_6 : f32 to vector<128x256xf32>
    %11 = arith.mulf %9, %10 : vector<128x256xf32>
    %cst_7 = arith.constant 5.000000e-01 : f32
    %12 = vector.broadcast %cst_7 : f32 to vector<128x256xf32>
    %13 = arith.addf %11, %12 : vector<128x256xf32>
    %14 = arith.truncf %13 : vector<128x256xf32> to vector<128x256xbf16>
    %c0_8 = arith.constant 0 : index
    %c0_9 = arith.constant 0 : index
    %15 = vector.load %arg4[%c0_8, %c0_9] : memref<256x128xbf16, #tpu.memory_space<vmem>>, vector<256x128xbf16>
    %cst_10 = arith.constant dense<0.000000e+00> : vector<128x128xf32>
    %16 = tpu.matmul %14, %15, %cst_10 {dimension_numbers = #tpu.dot_dimension_numbers<[1], [0], [0], [1], [0, 0, 1, 1], [], []>} : vector<128x256xbf16>, vector<256x128xbf16>, vector<128x128xf32> -> vector<128x128xf32>
    %c0_11 = arith.constant 0 : index
    %c0_12 = arith.constant 0 : index
    %17 = vector.load %arg5[%c0_11, %c0_12] : memref<1x128xf32, #tpu.memory_space<vmem>>, vector<1x128xf32>
    %18 = vector.broadcast %17 : vector<1x128xf32> to vector<128x128xf32>
    %19 = arith.addf %16, %18 : vector<128x128xf32>
    %cst_13 = arith.constant 5.000000e-01 : f32
    %20 = vector.broadcast %cst_13 : f32 to vector<128x128xf32>
    %21 = arith.mulf %19, %20 : vector<128x128xf32>
    %22 = math.tanh %21 : vector<128x128xf32>
    %cst_14 = arith.constant 5.000000e-01 : f32
    %23 = vector.broadcast %cst_14 : f32 to vector<128x128xf32>
    %24 = arith.mulf %22, %23 : vector<128x128xf32>
    %cst_15 = arith.constant 5.000000e-01 : f32
    %25 = vector.broadcast %cst_15 : f32 to vector<128x128xf32>
    %26 = arith.addf %24, %25 : vector<128x128xf32>
    %c0_16 = arith.constant 0 : index
    %c0_17 = arith.constant 0 : index
    %27 = vector.load %arg6[%c0_16, %c0_17] : memref<1x128xbf16, #tpu.memory_space<vmem>>, vector<1x128xbf16>
    %28 = arith.extf %27 : vector<1x128xbf16> to vector<1x128xf32>
    %29 = vector.broadcast %28 : vector<1x128xf32> to vector<128x128xf32>
    %30 = arith.mulf %26, %29 : vector<128x128xf32>
    %cst_18 = arith.constant dense<0.000000e+00> : vector<128xf32>
    %31 = vector.multi_reduction <add>, %30, %cst_18 [1] : vector<128x128xf32> to vector<128xf32>
    %32 = vector.shape_cast %31 : vector<128xf32> to vector<128x1xf32>
    %c0_19 = arith.constant 0 : index
    %c0_20 = arith.constant 0 : index
    %33 = vector.load %arg7[%c0_19, %c0_20] : memref<1x1xf32, #tpu.memory_space<vmem>>, vector<1x1xf32>
    %34 = vector.broadcast %33 : vector<1x1xf32> to vector<128x1xf32>
    %35 = arith.addf %32, %34 : vector<128x1xf32>
    %c0_21 = arith.constant 0 : index
    %c0_22 = arith.constant 0 : index
    %36 = vector.load %arg8[%c0_21, %c0_22] : memref<128x1xf32, #tpu.memory_space<vmem>>, vector<128x1xf32>
    tpu.vector_store %arg8[%c0_21, %c0_22], %35 {strides = array<i32>} : memref<128x1xf32, #tpu.memory_space<vmem>>, vector<128x1xf32>,
    return
  }
  func.func @transform_0(%arg0: i32) -> (i32, i32) {
    %c0_i32 = arith.constant 0 : i32
    %c0_i32_0 = arith.constant 0 : i32
    return %arg0, %c0_i32 : i32, i32
  }
  func.func @transform_1(%arg0: i32) -> (i32, i32) {
    %c0_i32 = arith.constant 0 : i32
    %c0_i32_0 = arith.constant 0 : i32
    %c0_i32_1 = arith.constant 0 : i32
    return %c0_i32, %c0_i32_0 : i32, i32
  }
  func.func @transform_2(%arg0: i32) -> (i32, i32) {
    %c0_i32 = arith.constant 0 : i32
    %c0_i32_0 = arith.constant 0 : i32
    %c0_i32_1 = arith.constant 0 : i32
    return %c0_i32, %c0_i32_0 : i32, i32
  }
  func.func @transform_3(%arg0: i32) -> (i32, i32) {
    %c0_i32 = arith.constant 0 : i32
    %c0_i32_0 = arith.constant 0 : i32
    %c0_i32_1 = arith.constant 0 : i32
    return %c0_i32, %c0_i32_0 : i32, i32
  }
  func.func @transform_4(%arg0: i32) -> (i32, i32) {
    %c0_i32 = arith.constant 0 : i32
    %c0_i32_0 = arith.constant 0 : i32
    %c0_i32_1 = arith.constant 0 : i32
    return %c0_i32, %c0_i32_0 : i32, i32
  }
  func.func @transform_5(%arg0: i32) -> (i32, i32) {
    %c0_i32 = arith.constant 0 : i32
    %c0_i32_0 = arith.constant 0 : i32
    %c0_i32_1 = arith.constant 0 : i32
    return %c0_i32, %c0_i32_0 : i32, i32
  }
  func.func @transform_6(%arg0: i32) -> (i32, i32) {
    %c0_i32 = arith.constant 0 : i32
    %c0_i32_0 = arith.constant 0 : i32
    %c0_i32_1 = arith.constant 0 : i32
    return %c0_i32, %c0_i32_0 : i32, i32
  }
  func.func @transform_7(%arg0: i32) -> (i32, i32) {
    %c0_i32 = arith.constant 0 : i32
    %c0_i32_0 = arith.constant 0 : i32
    return %arg0, %c0_i32 : i32, i32
  }
}

</mosaic_0001>

<llo_original>
// kernel: tpu_custom_call.1
$region0: #{tpu_custom_call.1}
  #allocation0 [shape = 'u32[]', space=smem, size = 0x4, offset = 0x4, fixed_abs, tag = 'smem constant byte address 0x4 - core index']
  #allocation1 [shape = 'u32[144,128]{1,0:T(1,128)}', space=vmem, size = 0x12000, scoped, tag = 'internal scratch']
  #allocation2 [shape = 'f32[1,1]{1,0:T(1,128)S(1)}', space=vmem, size = 0x200, scoped, tag = 'scoped memory for tpu_custom_call.1']
  %s0 = inlined_call_operand.vmem [shape: f32[128,32], index: 0, kind: input, shape index: {}]
  %s1 = inlined_call_operand.vmem [shape: bf16[32,256], index: 1, kind: input, shape index: {}]
  %s2 = inlined_call_operand.vmem [shape: f32[1,256], index: 2, kind: input, shape index: {}]
  %s3 = inlined_call_operand.vmem [shape: bf16[256,128], index: 3, kind: input, shape index: {}]
  %s4 = inlined_call_operand.vmem [shape: f32[1,128], index: 4, kind: input, shape index: {}]
  %s5 = inlined_call_operand.vmem [shape: bf16[1,128], index: 5, kind: input, shape index: {}]
  %s6 = inlined_call_operand.<no memory space> [shape: f32[1,1], index: 6, kind: input, shape index: {}]
  %s7 = inlined_call_operand.vmem [shape: f32[128,1], index: 7, kind: output, shape index: {}]
  %s8 = sld [smem:[#allocation0]]
  $region38: #{tpu_custom_call.1} parent=0
    _
  %s10 = ssub.s32 1, %s8
  %s11 = scalar_select 0, %s10, %s8
  %v12 = vstv %s6
  %13 = vst [vmem:[#allocation2] sm:$0x1] %v12
  // Predicated region
  $region2: #{tpu_custom_call.1} parent=0 // pred_check
    _
  $region3: #{tpu_custom_call.1} parent=0 // pred_check_branch
    %15 = sbr.rel (0) target = $region5
  $region4: #{tpu_custom_call.1} parent=0 // pred_region
    _
  $region5: #{tpu_custom_call.1} parent=0 // pred_fallthru
    _
  // Predicated region
  $region6: #{tpu_custom_call.1} parent=0 // pred_check
    _
  $region7: #{tpu_custom_call.1} parent=0 // pred_check_branch
    %17 = sbr.rel (0) target = $region9
  $region8: #{tpu_custom_call.1} parent=0 // pred_region
    _
  $region9: #{tpu_custom_call.1} parent=0 // pred_fallthru
    _
  // Predicated region
  $region10: #{tpu_custom_call.1} parent=0 // pred_check
    _
  $region11: #{tpu_custom_call.1} parent=0 // pred_check_branch
    %19 = sbr.rel (0) target = $region13
  $region12: #{tpu_custom_call.1} parent=0 // pred_region
    _
  $region13: #{tpu_custom_call.1} parent=0 // pred_fallthru
    _
  // Predicated region
  $region14: #{tpu_custom_call.1} parent=0 // pred_check
    _
  $region15: #{tpu_custom_call.1} parent=0 // pred_check_branch
    %21 = sbr.rel (0) target = $region17
  $region16: #{tpu_custom_call.1} parent=0 // pred_region
    _
  $region17: #{tpu_custom_call.1} parent=0 // pred_fallthru
    _
  // Predicated region
  $region18: #{tpu_custom_call.1} parent=0 // pred_check
    _
  $region19: #{tpu_custom_call.1} parent=0 // pred_check_branch
    %23 = sbr.rel (0) target = $region21
  $region20: #{tpu_custom_call.1} parent=0 // pred_region
    _
  $region21: #{tpu_custom_call.1} parent=0 // pred_fallthru
    _
  // Predicated region
  $region22: #{tpu_custom_call.1} parent=0 // pred_check
    _
  $region23: #{tpu_custom_call.1} parent=0 // pred_check_branch
    %25 = sbr.rel (0) target = $region25
  $region24: #{tpu_custom_call.1} parent=0 // pred_region
    _
  $region25: #{tpu_custom_call.1} parent=0 // pred_fallthru
    _
  // Predicated region
  $region26: #{tpu_custom_call.1} parent=0 // pred_check
    _
  $region27: #{tpu_custom_call.1} parent=0 // pred_check_branch
    %27 = sbr.rel (0) target = $region29
  $region28: #{tpu_custom_call.1} parent=0 // pred_region
    _
  $region29: #{tpu_custom_call.1} parent=0 // pred_fallthru
    _
  %v29 = vld [vmem:[%s0] sm:$0xff]
  %v30 = vld [vmem:[%s0 + $0x8] sm:$0xff]
  %v31 = vld [vmem:[%s0 + $0x10] sm:$0xff]
  %v32 = vld [vmem:[%s0 + $0x18] sm:$0xff]
  %v33 = vld [vmem:[%s0 + $0x20] sm:$0xff]
  %v34 = vld [vmem:[%s0 + $0x28] sm:$0xff]
  %v35 = vld [vmem:[%s0 + $0x30] sm:$0xff]
  %v36 = vld [vmem:[%s0 + $0x38] sm:$0xff]
  %v37 = vld [vmem:[%s0 + $0x40] sm:$0xff]
  %v38 = vld [vmem:[%s0 + $0x48] sm:$0xff]
  %v39 = vld [vmem:[%s0 + $0x50] sm:$0xff]
  %v40 = vld [vmem:[%s0 + $0x58] sm:$0xff]
  %v41 = vld [vmem:[%s0 + $0x60] sm:$0xff]
  %v42 = vld [vmem:[%s0 + $0x68] sm:$0xff]
  %v43 = vld [vmem:[%s0 + $0x70] sm:$0xff]
  %v44 = vld [vmem:[%s0 + $0x78] sm:$0xff]
  %v45 = vpack.c.bf16 %v30, %v29
  %v46 = vpack.c.bf16 %v32, %v31
  %v47 = vpack.c.bf16 %v34, %v33
  %v48 = vpack.c.bf16 %v36, %v35
  %v49 = vpack.c.bf16 %v38, %v37
  %v50 = vpack.c.bf16 %v40, %v39
  %v51 = vpack.c.bf16 %v42, %v41
  %v52 = vpack.c.bf16 %v44, %v43
  %v53 = vld [vmem:[%s1] sm:$0xff]
  %v54 = vld [vmem:[%s1 + $0x8] sm:$0xff]
  %v55 = vld [vmem:[%s1 + $0x10] sm:$0xff]
  %v56 = vld [vmem:[%s1 + $0x18] sm:$0xff]
  %v57 = vld [vmem:[%s2] sm:$0x3]
  %v59 = vlaneseq
  %v60 = vshrl.u32 %v59, 7
  %v61 = vsub.s32 0, %v60
  %v62 = vrot.slane %v57, %v61
  %v63 = vlaneseq
  %v64 = vshrl.u32 %v63, 7
  %v65 = vsub.s32 1, %v64
  %v66 = vrot.slane %v57, %v65
  %v73 = vunpack.c.l.b16 %v53
  %v74 = vunpack.c.h.b16 %v53
  %v75 = vunpack.c.l.b16 %v54
  %v76 = vunpack.c.h.b16 %v54
  %v77 = vunpack.c.l.b16 %v55
  %v78 = vunpack.c.h.b16 %v55
  %v79 = vunpack.c.l.b16 %v56
  %v80 = vunpack.c.h.b16 %v56
  %v81 = vpack.c.b16 %v75, %v73
  %v82 = vpack.c.b16 %v76, %v74
  %v83 = vpack.c.b16 %v79, %v77
  %v84 = vpack.c.b16 %v80, %v78
  %vm89 = vcmask 261120
  %v91 = vsel %vm89, %v45, 0
  %v94 = vsel %vm89, %v46, 0
  %v97 = vsel %vm89, %v47, 0
  %v100 = vsel %vm89, %v48, 0
  %v103 = vsel %vm89, %v49, 0
  %v106 = vsel %vm89, %v50, 0
  %v109 = vsel %vm89, %v51, 0
  %v112 = vsel %vm89, %v52, 0
  %114 = vmatprep.subr.bf16.mxu0 %v82
  %115 = vmatpush1.bf16.msra.mxu0 %v81
  %116 = vmatprep.subr.bf16.mxu0 %v84
  %117 = vmatpush1.bf16.msra.mxu0 %v83
  %118 = vmatprep.subr.bf16.mxu0 0
  %119 = vmatpush1.bf16.msra.mxu0 0
  %120 = vmatprep.subr.bf16.mxu0 0
  %121 = vmatpush1.bf16.msra.mxu0 0
  %122 = vmatprep.subr.bf16.mxu0 0
  %123 = vmatpush1.bf16.msra.mxu0 0
  %124 = vmatprep.subr.bf16.mxu0 0
  %125 = vmatpush1.bf16.msra.mxu0 0
  %126 = vmatprep.subr.bf16.mxu0 0
  %127 = vmatpush1.bf16.msra.mxu0 0
  %128 = vmatprep.subr.bf16.mxu0 0
  %129 = vmatpush1.bf16.msra.mxu0 0
  %130 = vmatprep.subr.bf16.mxu0 0
  %131 = vmatpush1.bf16.msra.mxu0 0
  %132 = vmatprep.subr.bf16.mxu0 0
  %133 = vmatpush1.bf16.msra.mxu0 0
  %134 = vmatprep.subr.bf16.mxu0 0
  %135 = vmatpush1.bf16.msra.mxu0 0
  %136 = vmatprep.subr.bf16.mxu0 0
  %137 = vmatpush1.bf16.msra.mxu0 0
  %138 = vmatprep.subr.bf16.mxu0 0
  %139 = vmatpush1.bf16.msra.mxu0 0
  %140 = vmatprep.subr.bf16.mxu0 0
  %141 = vmatpush1.bf16.msra.mxu0 0
  %142 = vmatprep.subr.bf16.mxu0 0
  %143 = vmatpush1.bf16.msra.mxu0 0
  %144 = vmatprep.subr.bf16.mxu0 0
  %145 = vmatpush1.bf16.msra.mxu0 0
  %146 = vmatprep.mubr.bf16.mxu0 0
  %147 = vmatmul.mubr.bf16.gmra.mrb[0].mxu0 %v91
  %v148 = vpop.f32.mrb[0].mxu0
  %v149 = vadd.f32 %v62, %v148
  %v150 = vpop.f32.mrb[0].mxu0
  %v151 = vadd.f32 %v66, %v150
  %v152 = vpop.f32.mrb[0].mxu0
  %v153 = vadd.f32 %v62, %v152
  %v154 = vpop.f32.mrb[0].mxu0
  %v155 = vadd.f32 %v66, %v154
  %156 = vmatprep.mubr.bf16.mxu0 0
  %157 = vmatmul.mubr.bf16.gmra.mrb[0].mxu0 %v94
  %v158 = vpop.f32.mrb[0].mxu0
  %v159 = vadd.f32 %v62, %v158
  %v160 = vpop.f32.mrb[0].mxu0
  %v161 = vadd.f32 %v66, %v160
  %v162 = vpop.f32.mrb[0].mxu0
  %v163 = vadd.f32 %v62, %v162
  %v164 = vpop.f32.mrb[0].mxu0
  %v165 = vadd.f32 %v66, %v164
  %166 = vmatprep.mubr.bf16.mxu0 0
  %167 = vmatmul.mubr.bf16.gmra.mrb[0].mxu0 %v97
  %v168 = vpop.f32.mrb[0].mxu0
  %v169 = vadd.f32 %v62, %v168
  %v170 = vpop.f32.mrb[0].mxu0
  %v171 = vadd.f32 %v66, %v170
  %v172 = vpop.f32.mrb[0].mxu0
  %v173 = vadd.f32 %v62, %v172
  %v174 = vpop.f32.mrb[0].mxu0
  %v175 = vadd.f32 %v66, %v174
  %176 = vmatprep.mubr.bf16.mxu0 0
  %177 = vmatmul.mubr.bf16.gmra.mrb[0].mxu0 %v100
  %v178 = vpop.f32.mrb[0].mxu0
  %v179 = vadd.f32 %v62, %v178
  %v180 = vpop.f32.mrb[0].mxu0
  %v181 = vadd.f32 %v66, %v180
  %v182 = vpop.f32.mrb[0].mxu0
  %v183 = vadd.f32 %v62, %v182
  %v184 = vpop.f32.mrb[0].mxu0
  %v185 = vadd.f32 %v66, %v184
  %186 = vmatprep.mubr.bf16.mxu0 0
  %187 = vmatmul.mubr.bf16.gmra.mrb[0].mxu0 %v103
  %v188 = vpop.f32.mrb[0].mxu0
  %v189 = vadd.f32 %v62, %v188
  %v190 = vpop.f32.mrb[0].mxu0
  %v191 = vadd.f32 %v66, %v190
  %v192 = vpop.f32.mrb[0].mxu0
  %v193 = vadd.f32 %v62, %v192
  %v194 = vpop.f32.mrb[0].mxu0
  %v195 = vadd.f32 %v66, %v194
  %196 = vmatprep.mubr.bf16.mxu0 0
  %197 = vmatmul.mubr.bf16.gmra.mrb[0].mxu0 %v106
  %v198 = vpop.f32.mrb[0].mxu0
  %v199 = vadd.f32 %v62, %v198
  %v200 = vpop.f32.mrb[0].mxu0
  %v201 = vadd.f32 %v66, %v200
  %v202 = vpop.f32.mrb[0].mxu0
  %v203 = vadd.f32 %v62, %v202
  %v204 = vpop.f32.mrb[0].mxu0
  %v205 = vadd.f32 %v66, %v204
  %206 = vmatprep.mubr.bf16.mxu0 0
  %207 = vmatmul.mubr.bf16.gmra.mrb[0].mxu0 %v109
  %v208 = vpop.f32.mrb[0].mxu0
  %v209 = vadd.f32 %v62, %v208
  %v210 = vpop.f32.mrb[0].mxu0
  %v211 = vadd.f32 %v66, %v210
  %v212 = vpop.f32.mrb[0].mxu0
  %v213 = vadd.f32 %v62, %v212
  %v214 = vpop.f32.mrb[0].mxu0
  %v215 = vadd.f32 %v66, %v214
  %216 = vmatprep.mubr.bf16.mxu0 0
  %217 = vmatmul.mubr.bf16.gmra.mrb[0].mxu0 %v112
  %v218 = vpop.f32.mrb[0].mxu0
  %v219 = vadd.f32 %v62, %v218
  %v220 = vpop.f32.mrb[0].mxu0
  %v221 = vadd.f32 %v66, %v220
  %v222 = vpop.f32.mrb[0].mxu0
  %v223 = vadd.f32 %v62, %v222
  %v224 = vpop.f32.mrb[0].mxu0
  %v225 = vadd.f32 %v66, %v224
  %226 = vdwg.mxu0
  %v227 = vmul.f32 %v149, 0.5
  %v228 = vmul.f32 %v151, 0.5
  %v229 = vmul.f32 %v153, 0.5
  %v230 = vmul.f32 %v155, 0.5
  %v231 = vmul.f32 %v159, 0.5
  %v232 = vmul.f32 %v161, 0.5
  %v233 = vmul.f32 %v163, 0.5
  %v234 = vmul.f32 %v165, 0.5
  %v235 = vmul.f32 %v169, 0.5
  %v236 = vmul.f32 %v171, 0.5
  %v237 = vmul.f32 %v173, 0.5
  %v238 = vmul.f32 %v175, 0.5
  %v239 = vmul.f32 %v179, 0.5
  %v240 = vmul.f32 %v181, 0.5
  %v241 = vmul.f32 %v183, 0.5
  %v242 = vmul.f32 %v185, 0.5
  %v243 = vmul.f32 %v189, 0.5
  %v244 = vmul.f32 %v191, 0.5
  %v245 = vmul.f32 %v193, 0.5
  %v246 = vmul.f32 %v195, 0.5
  %v247 = vmul.f32 %v199, 0.5
  %v248 = vmul.f32 %v201, 0.5
  %v249 = vmul.f32 %v203, 0.5
  %v250 = vmul.f32 %v205, 0.5
  %v251 = vmul.f32 %v209, 0.5
  %v252 = vmul.f32 %v211, 0.5
  %v253 = vmul.f32 %v213, 0.5
  %v254 = vmul.f32 %v215, 0.5
  %v255 = vmul.f32 %v219, 0.5
  %v256 = vmul.f32 %v221, 0.5
  %v257 = vmul.f32 %v223, 0.5
  %v258 = vmul.f32 %v225, 0.5
  %v259 = vtanh.pop %v227
  %v260 = vtanh.pop %v228
  %v261 = vtanh.pop %v229
  %v262 = vtanh.pop %v230
  %v263 = vtanh.pop %v231
  %v264 = vtanh.pop %v232
  %v265 = vtanh.pop %v233
  %v266 = vtanh.pop %v234
  %v267 = vtanh.pop %v235
  %v268 = vtanh.pop %v236
  %v269 = vtanh.pop %v237
  %v270 = vtanh.pop %v238
  %v271 = vtanh.pop %v239
  %v272 = vtanh.pop %v240
  %v273 = vtanh.pop %v241
  %v274 = vtanh.pop %v242
  %v275 = vtanh.pop %v243
  %v276 = vtanh.pop %v244
  %v277 = vtanh.pop %v245
  %v278 = vtanh.pop %v246
  %v279 = vtanh.pop %v247
  %v280 = vtanh.pop %v248
  %v281 = vtanh.pop %v249
  %v282 = vtanh.pop %v250
  %v283 = vtanh.pop %v251
  %v284 = vtanh.pop %v252
  %v285 = vtanh.pop %v253
  %v286 = vtanh.pop %v254
  %v287 = vtanh.pop %v255
  %v288 = vtanh.pop %v256
  %v289 = vtanh.pop %v257
  %v290 = vtanh.pop %v258
  %v291 = vmul.f32 %v259, 0.5
  %v292 = vmul.f32 %v260, 0.5
  %v293 = vmul.f32 %v261, 0.5
  %v294 = vmul.f32 %v262, 0.5
  %v295 = vmul.f32 %v263, 0.5
  %v296 = vmul.f32 %v264, 0.5
  %v297 = vmul.f32 %v265, 0.5
  %v298 = vmul.f32 %v266, 0.5
  %v299 = vmul.f32 %v267, 0.5
  %v300 = vmul.f32 %v268, 0.5
  %v301 = vmul.f32 %v269, 0.5
  %v302 = vmul.f32 %v270, 0.5
  %v303 = vmul.f32 %v271, 0.5
  %v304 = vmul.f32 %v272, 0.5
  %v305 = vmul.f32 %v273, 0.5
  %v306 = vmul.f32 %v274, 0.5
  %v307 = vmul.f32 %v275, 0.5
  %v308 = vmul.f32 %v276, 0.5
  %v309 = vmul.f32 %v277, 0.5
  %v310 = vmul.f32 %v278, 0.5
  %v311 = vmul.f32 %v279, 0.5
  %v312 = vmul.f32 %v280, 0.5
  %v313 = vmul.f32 %v281, 0.5
  %v314 = vmul.f32 %v282, 0.5
  %v315 = vmul.f32 %v283, 0.5
  %v316 = vmul.f32 %v284, 0.5
  %v317 = vmul.f32 %v285, 0.5
  %v318 = vmul.f32 %v286, 0.5
  %v319 = vmul.f32 %v287, 0.5
  %v320 = vmul.f32 %v288, 0.5
  %v321 = vmul.f32 %v289, 0.5
  %v322 = vmul.f32 %v290, 0.5
  %v323 = vadd.f32 %v291, 0.5
  %v324 = vadd.f32 %v292, 0.5
  %v325 = vadd.f32 %v293, 0.5
  %v326 = vadd.f32 %v294, 0.5
  %v327 = vadd.f32 %v295, 0.5
  %v328 = vadd.f32 %v296, 0.5
  %v329 = vadd.f32 %v297, 0.5
  %v330 = vadd.f32 %v298, 0.5
  %v331 = vadd.f32 %v299, 0.5
  %v332 = vadd.f32 %v300, 0.5
  %v333 = vadd.f32 %v301, 0.5
  %v334 = vadd.f32 %v302, 0.5
  %v335 = vadd.f32 %v303, 0.5
  %v336 = vadd.f32 %v304, 0.5
  %v337 = vadd.f32 %v305, 0.5
  %v338 = vadd.f32 %v306, 0.5
  %v339 = vadd.f32 %v307, 0.5
  %v340 = vadd.f32 %v308, 0.5
  %v341 = vadd.f32 %v309, 0.5
  %v342 = vadd.f32 %v310, 0.5
  %v343 = vadd.f32 %v311, 0.5
  %v344 = vadd.f32 %v312, 0.5
  %v345 = vadd.f32 %v313, 0.5
  %v346 = vadd.f32 %v314, 0.5
  %v347 = vadd.f32 %v315, 0.5
  %v348 = vadd.f32 %v316, 0.5
  %v349 = vadd.f32 %v317, 0.5
  %v350 = vadd.f32 %v318, 0.5
  %v351 = vadd.f32 %v319, 0.5
  %v352 = vadd.f32 %v320, 0.5
  %v353 = vadd.f32 %v321, 0.5
  %v354 = vadd.f32 %v322, 0.5
  %v355 = vpack.c.bf16 %v325, %v323
  %v356 = vpack.c.bf16 %v326, %v324
  %v357 = vpack.c.bf16 %v329, %v327
  %v358 = vpack.c.bf16 %v330, %v328
  %v359 = vpack.c.bf16 %v333, %v331
  %v360 = vpack.c.bf16 %v334, %v332
  %v361 = vpack.c.bf16 %v337, %v335
  %v362 = vpack.c.bf16 %v338, %v336
  %v363 = vpack.c.bf16 %v341, %v339
  %v364 = vpack.c.bf16 %v342, %v340
  %v365 = vpack.c.bf16 %v345, %v343
  %v366 = vpack.c.bf16 %v346, %v344
  %v367 = vpack.c.bf16 %v349, %v347
  %v368 = vpack.c.bf16 %v350, %v348
  %v369 = vpack.c.bf16 %v353, %v351
  %v370 = vpack.c.bf16 %v354, %v352
  %v371 = vld [vmem:[%s3] sm:$0xf]
  %v372 = vld [vmem:[%s3 + $0x4] sm:$0xf]
  %v373 = vld [vmem:[%s3 + $0x8] sm:$0xf]
  %v374 = vld [vmem:[%s3 + $0xc] sm:$0xf]
  %v375 = vld [vmem:[%s3 + $0x10] sm:$0xf]
  %v376 = vld [vmem:[%s3 + $0x14] sm:$0xf]
  %v377 = vld [vmem:[%s3 + $0x18] sm:$0xf]
  %v378 = vld [vmem:[%s3 + $0x1c] sm:$0xf]
  %v379 = vld [vmem:[%s3 + $0x20] sm:$0xf]
  %v380 = vld [vmem:[%s3 + $0x24] sm:$0xf]
  %v381 = vld [vmem:[%s3 + $0x28] sm:$0xf]
  %v382 = vld [vmem:[%s3 + $0x2c] sm:$0xf]
  %v383 = vld [vmem:[%s3 + $0x30] sm:$0xf]
  %v384 = vld [vmem:[%s3 + $0x34] sm:$0xf]
  %v385 = vld [vmem:[%s3 + $0x38] sm:$0xf]
  %v386 = vld [vmem:[%s3 + $0x3c] sm:$0xf]
  %v387 = vld [vmem:[%s3 + $0x40] sm:$0xf]
  %v388 = vld [vmem:[%s3 + $0x44] sm:$0xf]
  %v389 = vld [vmem:[%s3 + $0x48] sm:$0xf]
  %v390 = vld [vmem:[%s3 + $0x4c] sm:$0xf]
  %v391 = vld [vmem:[%s3 + $0x50] sm:$0xf]
  %v392 = vld [vmem:[%s3 + $0x54] sm:$0xf]
  %v393 = vld [vmem:[%s3 + $0x58] sm:$0xf]
  %v394 = vld [vmem:[%s3 + $0x5c] sm:$0xf]
  %v395 = vld [vmem:[%s3 + $0x60] sm:$0xf]
  %v396 = vld [vmem:[%s3 + $0x64] sm:$0xf]
  %v397 = vld [vmem:[%s3 + $0x68] sm:$0xf]
  %v398 = vld [vmem:[%s3 + $0x6c] sm:$0xf]
  %v399 = vld [vmem:[%s3 + $0x70] sm:$0xf]
  %v400 = vld [vmem:[%s3 + $0x74] sm:$0xf]
  %v401 = vld [vmem:[%s3 + $0x78] sm:$0xf]
  %v402 = vld [vmem:[%s3 + $0x7c] sm:$0xf]
  %v403 = vld [vmem:[%s4] sm:$0x1]
  %v405 = vlaneseq
  %v406 = vshrl.u32 %v405, 7
  %v407 = vsub.s32 0, %v406
  %v408 = vrot.slane %v403, %v407
  %v442 = vunpack.c.l.b16 %v371
  %v443 = vunpack.c.l.b16 %v372
  %v444 = vunpack.c.l.b16 %v373
  %v445 = vunpack.c.l.b16 %v374
  %v446 = vunpack.c.l.b16 %v375
  %v447 = vunpack.c.l.b16 %v376
  %v448 = vunpack.c.l.b16 %v377
  %v449 = vunpack.c.l.b16 %v378
  %v450 = vunpack.c.l.b16 %v379
  %v451 = vunpack.c.l.b16 %v380
  %v452 = vunpack.c.l.b16 %v381
  %v453 = vunpack.c.l.b16 %v382
  %v454 = vunpack.c.l.b16 %v383
  %v455 = vunpack.c.l.b16 %v384
  %v456 = vunpack.c.l.b16 %v385
  %v457 = vunpack.c.l.b16 %v386
  %v458 = vunpack.c.l.b16 %v387
  %v459 = vunpack.c.l.b16 %v388
  %v460 = vunpack.c.l.b16 %v389
  %v461 = vunpack.c.l.b16 %v390
  %v462 = vunpack.c.l.b16 %v391
  %v463 = vunpack.c.l.b16 %v392
  %v464 = vunpack.c.l.b16 %v393
  %v465 = vunpack.c.l.b16 %v394
  %v466 = vunpack.c.l.b16 %v395
  %v467 = vunpack.c.l.b16 %v396
  %v468 = vunpack.c.l.b16 %v397
  %v469 = vunpack.c.l.b16 %v398
  %v470 = vunpack.c.l.b16 %v399
  %v471 = vunpack.c.l.b16 %v400
  %v472 = vunpack.c.l.b16 %v401
  %v473 = vunpack.c.l.b16 %v402
  %v474 = vpack.c.b16 %v443, %v442
  %v475 = vpack.c.b16 %v445, %v444
  %v476 = vpack.c.b16 %v447, %v446
  %v477 = vpack.c.b16 %v449, %v448
  %v478 = vpack.c.b16 %v451, %v450
  %v479 = vpack.c.b16 %v453, %v452
  %v480 = vpack.c.b16 %v455, %v454
  %v481 = vpack.c.b16 %v457, %v456
  %v482 = vpack.c.b16 %v459, %v458
  %v483 = vpack.c.b16 %v461, %v460
  %v484 = vpack.c.b16 %v463, %v462
  %v485 = vpack.c.b16 %v465, %v464
  %v486 = vpack.c.b16 %v467, %v466
  %v487 = vpack.c.b16 %v469, %v468
  %v488 = vpack.c.b16 %v471, %v470
  %v489 = vpack.c.b16 %v473, %v472
  %506 = vmatprep.subr.bf16.mxu0 0
  %507 = vmatpush1.bf16.msra.mxu0 %v474
  %508 = vmatprep.subr.bf16.mxu0 0
  %509 = vmatpush1.bf16.msra.mxu0 %v475
  %510 = vmatprep.subr.bf16.mxu0 0
  %511 = vmatpush1.bf16.msra.mxu0 %v476
  %512 = vmatprep.subr.bf16.mxu0 0
  %513 = vmatpush1.bf16.msra.mxu0 %v477
  %514 = vmatprep.subr.bf16.mxu0 0
  %515 = vmatpush1.bf16.msra.mxu0 %v478
  %516 = vmatprep.subr.bf16.mxu0 0
  %517 = vmatpush1.bf16.msra.mxu0 %v479
  %518 = vmatprep.subr.bf16.mxu0 0
  %519 = vmatpush1.bf16.msra.mxu0 %v480
  %520 = vmatprep.subr.bf16.mxu0 0
  %521 = vmatpush1.bf16.msra.mxu0 %v481
  %522 = vmatprep.subr.bf16.mxu0 0
  %523 = vmatpush1.bf16.msra.mxu0 %v482
  %524 = vmatprep.subr.bf16.mxu0 0
  %525 = vmatpush1.bf16.msra.mxu0 %v483
  %526 = vmatprep.subr.bf16.mxu0 0
  %527 = vmatpush1.bf16.msra.mxu0 %v484
  %528 = vmatprep.subr.bf16.mxu0 0
  %529 = vmatpush1.bf16.msra.mxu0 %v485
  %530 = vmatprep.subr.bf16.mxu0 0
  %531 = vmatpush1.bf16.msra.mxu0 %v486
  %532 = vmatprep.subr.bf16.mxu0 0
  %533 = vmatpush1.bf16.msra.mxu0 %v487
  %534 = vmatprep.subr.bf16.mxu0 0
  %535 = vmatpush1.bf16.msra.mxu0 %v488
  %536 = vmatprep.subr.bf16.mxu0 0
  %537 = vmatpush1.bf16.msra.mxu0 %v489
  %538 = vmatprep.mubr.bf16.mxu0 %v356
  %539 = vmatmul.mubr.bf16.gmra.mrb[0].mxu0 %v355
  %v540 = vpop.f32.mrb[0].mxu0
  %v541 = vadd.f32 %v408, %v540
  %v542 = vpop.f32.mrb[0].mxu0
  %v543 = vpop.f32.mrb[0].mxu0
  %v544 = vadd.f32 %v408, %v543
  %v545 = vpop.f32.mrb[0].mxu0
  %546 = vmatprep.mubr.bf16.mxu0 %v358
  %547 = vmatmul.mubr.bf16.gmra.mrb[0].mxu0 %v357
  %v548 = vpop.f32.mrb[0].mxu0
  %v549 = vadd.f32 %v408, %v548
  %v550 = vpop.f32.mrb[0].mxu0
  %v551 = vpop.f32.mrb[0].mxu0
  %v552 = vadd.f32 %v408, %v551
  %v553 = vpop.f32.mrb[0].mxu0
  %554 = vmatprep.mubr.bf16.mxu0 %v360
  %555 = vmatmul.mubr.bf16.gmra.mrb[0].mxu0 %v359
  %v556 = vpop.f32.mrb[0].mxu0
  %v557 = vadd.f32 %v408, %v556
  %v558 = vpop.f32.mrb[0].mxu0
  %v559 = vpop.f32.mrb[0].mxu0
  %v560 = vadd.f32 %v408, %v559
  %v561 = vpop.f32.mrb[0].mxu0
  %562 = vmatprep.mubr.bf16.mxu0 %v362
  %563 = vmatmul.mubr.bf16.gmra.mrb[0].mxu0 %v361
  %v564 = vpop.f32.mrb[0].mxu0
  %v565 = vadd.f32 %v408, %v564
  %v566 = vpop.f32.mrb[0].mxu0
  %v567 = vpop.f32.mrb[0].mxu0
  %v568 = vadd.f32 %v408, %v567
  %v569 = vpop.f32.mrb[0].mxu0
  %570 = vmatprep.mubr.bf16.mxu0 %v364
  %571 = vmatmul.mubr.bf16.gmra.mrb[0].mxu0 %v363
  %v572 = vpop.f32.mrb[0].mxu0
  %v573 = vadd.f32 %v408, %v572
  %v574 = vpop.f32.mrb[0].mxu0
  %v575 = vpop.f32.mrb[0].mxu0
  %v576 = vadd.f32 %v408, %v575
  %v577 = vpop.f32.mrb[0].mxu0
  %578 = vmatprep.mubr.bf16.mxu0 %v366
  %579 = vmatmul.mubr.bf16.gmra.mrb[0].mxu0 %v365
  %v580 = vpop.f32.mrb[0].mxu0
  %v581 = vadd.f32 %v408, %v580
  %v582 = vpop.f32.mrb[0].mxu0
  %v583 = vpop.f32.mrb[0].mxu0
  %v584 = vadd.f32 %v408, %v583
  %v585 = vpop.f32.mrb[0].mxu0
  %586 = vmatprep.mubr.bf16.mxu0 %v368
  %587 = vmatmul.mubr.bf16.gmra.mrb[0].mxu0 %v367
  %v588 = vpop.f32.mrb[0].mxu0
  %v589 = vadd.f32 %v408, %v588
  %v590 = vpop.f32.mrb[0].mxu0
  %v591 = vpop.f32.mrb[0].mxu0
  %v592 = vadd.f32 %v408, %v591
  %v593 = vpop.f32.mrb[0].mxu0
  %594 = vmatprep.mubr.bf16.mxu0 %v370
  %595 = vmatmul.mubr.bf16.gmra.mrb[0].mxu0 %v369
  %v596 = vpop.f32.mrb[0].mxu0
  %v597 = vadd.f32 %v408, %v596
  %v598 = vpop.f32.mrb[0].mxu0
  %v599 = vpop.f32.mrb[0].mxu0
  %v600 = vadd.f32 %v408, %v599
  %v601 = vpop.f32.mrb[0].mxu0
  %602 = vdwg.mxu0
  %v603 = vmul.f32 %v541, 0.5
  %v604 = vmul.f32 %v544, 0.5
  %v605 = vmul.f32 %v549, 0.5
  %v606 = vmul.f32 %v552, 0.5
  %v607 = vmul.f32 %v557, 0.5
  %v608 = vmul.f32 %v560, 0.5
  %v609 = vmul.f32 %v565, 0.5
  %v610 = vmul.f32 %v568, 0.5
  %v611 = vmul.f32 %v573, 0.5
  %v612 = vmul.f32 %v576, 0.5
  %v613 = vmul.f32 %v581, 0.5
  %v614 = vmul.f32 %v584, 0.5
  %v615 = vmul.f32 %v589, 0.5
  %v616 = vmul.f32 %v592, 0.5
  %v617 = vmul.f32 %v597, 0.5
  %v618 = vmul.f32 %v600, 0.5
  %v619 = vtanh.pop %v603
  %v620 = vtanh.pop %v604
  %v621 = vtanh.pop %v605
  %v622 = vtanh.pop %v606
  %v623 = vtanh.pop %v607
  %v624 = vtanh.pop %v608
  %v625 = vtanh.pop %v609
  %v626 = vtanh.pop %v610
  %v627 = vtanh.pop %v611
  %v628 = vtanh.pop %v612
  %v629 = vtanh.pop %v613
  %v630 = vtanh.pop %v614
  %v631 = vtanh.pop %v615
  %v632 = vtanh.pop %v616
  %v633 = vtanh.pop %v617
  %v634 = vtanh.pop %v618
  %v635 = vmul.f32 %v619, 0.5
  %v636 = vmul.f32 %v620, 0.5
  %v637 = vmul.f32 %v621, 0.5
  %v638 = vmul.f32 %v622, 0.5
  %v639 = vmul.f32 %v623, 0.5
  %v640 = vmul.f32 %v624, 0.5
  %v641 = vmul.f32 %v625, 0.5
  %v642 = vmul.f32 %v626, 0.5
  %v643 = vmul.f32 %v627, 0.5
  %v644 = vmul.f32 %v628, 0.5
  %v645 = vmul.f32 %v629, 0.5
  %v646 = vmul.f32 %v630, 0.5
  %v647 = vmul.f32 %v631, 0.5
  %v648 = vmul.f32 %v632, 0.5
  %v649 = vmul.f32 %v633, 0.5
  %v650 = vmul.f32 %v634, 0.5
  %v651 = vadd.f32 %v635, 0.5
  %v652 = vadd.f32 %v636, 0.5
  %v653 = vadd.f32 %v637, 0.5
  %v654 = vadd.f32 %v638, 0.5
  %v655 = vadd.f32 %v639, 0.5
  %v656 = vadd.f32 %v640, 0.5
  %v657 = vadd.f32 %v641, 0.5
  %v658 = vadd.f32 %v642, 0.5
  %v659 = vadd.f32 %v643, 0.5
  %v660 = vadd.f32 %v644, 0.5
  %v661 = vadd.f32 %v645, 0.5
  %v662 = vadd.f32 %v646, 0.5
  %v663 = vadd.f32 %v647, 0.5
  %v664 = vadd.f32 %v648, 0.5
  %v665 = vadd.f32 %v649, 0.5
  %v666 = vadd.f32 %v650, 0.5
  %v667 = vld [vmem:[%s5] sm:$0x1]
  %v668 = vunpack.c.l.bf16 %v667
  %v669 = vlaneseq
  %v670 = vshrl.u32 %v669, 7
  %v671 = vsub.s32 0, %v670
  %v672 = vrot.slane %v668, %v671
  %v673 = vmul.f32 %v651, %v672
  %v674 = vmul.f32 %v652, %v672
  %v675 = vmul.f32 %v653, %v672
  %v676 = vmul.f32 %v654, %v672
  %v677 = vmul.f32 %v655, %v672
  %v678 = vmul.f32 %v656, %v672
  %v679 = vmul.f32 %v657, %v672
  %v680 = vmul.f32 %v658, %v672
  %v681 = vmul.f32 %v659, %v672
  %v682 = vmul.f32 %v660, %v672
  %v683 = vmul.f32 %v661, %v672
  %v684 = vmul.f32 %v662, %v672
  %v685 = vmul.f32 %v663, %v672
  %v686 = vmul.f32 %v664, %v672
  %v687 = vmul.f32 %v665, %v672
  %v688 = vmul.f32 %v666, %v672
  %689 = vadd.xlane.f32.xlu0 %v673
  %v690 = vpop.xlane.xlu0 %689
  %691 = vadd.xlane.f32.xlu0 %v674
  %v692 = vpop.xlane.xlu0 %691
  %693 = vadd.xlane.f32.xlu0 %v675
  %v694 = vpop.xlane.xlu0 %693
  %695 = vadd.xlane.f32.xlu0 %v676
  %v696 = vpop.xlane.xlu0 %695
  %697 = vadd.xlane.f32.xlu0 %v677
  %v698 = vpop.xlane.xlu0 %697
  %699 = vadd.xlane.f32.xlu0 %v678
  %v700 = vpop.xlane.xlu0 %699
  %701 = vadd.xlane.f32.xlu0 %v679
  %v702 = vpop.xlane.xlu0 %701
  %703 = vadd.xlane.f32.xlu0 %v680
  %v704 = vpop.xlane.xlu0 %703
  %705 = vadd.xlane.f32.xlu0 %v681
  %v706 = vpop.xlane.xlu0 %705
  %707 = vadd.xlane.f32.xlu0 %v682
  %v708 = vpop.xlane.xlu0 %707
  %709 = vadd.xlane.f32.xlu0 %v683
  %v710 = vpop.xlane.xlu0 %709
  %711 = vadd.xlane.f32.xlu0 %v684
  %v712 = vpop.xlane.xlu0 %711
  %713 = vadd.xlane.f32.xlu0 %v685
  %v714 = vpop.xlane.xlu0 %713
  %715 = vadd.xlane.f32.xlu0 %v686
  %v716 = vpop.xlane.xlu0 %715
  %717 = vadd.xlane.f32.xlu0 %v687
  %v718 = vpop.xlane.xlu0 %717
  %719 = vadd.xlane.f32.xlu0 %v688
  %v720 = vpop.xlane.xlu0 %719
  %v721 = vld [vmem:[#allocation2] sm:$0x1]
  %v723 = vlaneseq
  %v724 = vshrl.u32 %v723, 7
  %v725 = vsub.s32 0, %v724
  %v726 = vrot.slane %v721, %v725
  %v728 = vadd.f32 %v690, %v726
  %v729 = vadd.f32 %v692, %v726
  %v730 = vadd.f32 %v694, %v726
  %v731 = vadd.f32 %v696, %v726
  %v732 = vadd.f32 %v698, %v726
  %v733 = vadd.f32 %v700, %v726
  %v734 = vadd.f32 %v702, %v726
  %v735 = vadd.f32 %v704, %v726
  %v736 = vadd.f32 %v706, %v726
  %v737 = vadd.f32 %v708, %v726
  %v738 = vadd.f32 %v710, %v726
  %v739 = vadd.f32 %v712, %v726
  %v740 = vadd.f32 %v714, %v726
  %v741 = vadd.f32 %v716, %v726
  %v742 = vadd.f32 %v718, %v726
  %v743 = vadd.f32 %v720, %v726
  %vm744 = vcmask 7168
  %745 = vst.msk [vmem:[%s7] sm:$0xff] %vm744, %v728
  %746 = vst.msk [vmem:[%s7 + $0x8] sm:$0xff] %vm744, %v729
  %747 = vst.msk [vmem:[%s7 + $0x10] sm:$0xff] %vm744, %v730
  %748 = vst.msk [vmem:[%s7 + $0x18] sm:$0xff] %vm744, %v731
  %749 = vst.msk [vmem:[%s7 + $0x20] sm:$0xff] %vm744, %v732
  %750 = vst.msk [vmem:[%s7 + $0x28] sm:$0xff] %vm744, %v733
  %751 = vst.msk [vmem:[%s7 + $0x30] sm:$0xff] %vm744, %v734
  %752 = vst.msk [vmem:[%s7 + $0x38] sm:$0xff] %vm744, %v735
  %753 = vst.msk [vmem:[%s7 + $0x40] sm:$0xff] %vm744, %v736
  %754 = vst.msk [vmem:[%s7 + $0x48] sm:$0xff] %vm744, %v737
  %755 = vst.msk [vmem:[%s7 + $0x50] sm:$0xff] %vm744, %v738
  %756 = vst.msk [vmem:[%s7 + $0x58] sm:$0xff] %vm744, %v739
  %757 = vst.msk [vmem:[%s7 + $0x60] sm:$0xff] %vm744, %v740
  %758 = vst.msk [vmem:[%s7 + $0x68] sm:$0xff] %vm744, %v741
  %759 = vst.msk [vmem:[%s7 + $0x70] sm:$0xff] %vm744, %v742
  %760 = vst.msk [vmem:[%s7 + $0x78] sm:$0xff] %vm744, %v743
  // Predicated region
  $region30: #{tpu_custom_call.1} parent=0 // pred_check
    _
  $region31: #{tpu_custom_call.1} parent=0 // pred_check_branch
    %762 = sbr.rel (0) target = $region33
  $region32: #{tpu_custom_call.1} parent=0 // pred_region
    _
  $region33: #{tpu_custom_call.1} parent=0 // pred_fallthru
    _
  // Predicated region
  $region34: #{tpu_custom_call.1} parent=0 // pred_check
    _
  $region35: #{tpu_custom_call.1} parent=0 // pred_check_branch
    %764 = sbr.rel (0) target = $region37
  $region36: #{tpu_custom_call.1} parent=0 // pred_region
    _
  $region37: #{tpu_custom_call.1} parent=0 // pred_fallthru
    _

// kernel: tpu_custom_call.1
$region0: #{tpu_custom_call.1}
  #allocation0 [shape = 'u32[]', space=smem, size = 0x4, offset = 0x4, fixed_abs, tag = 'smem constant byte address 0x4 - core index']
  #allocation1 [shape = 'u32[144,128]{1,0:T(1,128)}', space=vmem, size = 0x12000, scoped, tag = 'internal scratch']
  #allocation2 [shape = 'f32[1,1]{1,0:T(1,128)S(1)}', space=vmem, size = 0x200, scoped, tag = 'scoped memory for tpu_custom_call.1']
  %s0 = inlined_call_operand.vmem [shape: f32[128,32], index: 0, kind: input, shape index: {}]
  %s1 = inlined_call_operand.vmem [shape: bf16[32,256], index: 1, kind: input, shape index: {}]
  %s2 = inlined_call_operand.vmem [shape: f32[1,256], index: 2, kind: input, shape index: {}]
  %s3 = inlined_call_operand.vmem [shape: bf16[256,128], index: 3, kind: input, shape index: {}]
  %s4 = inlined_call_operand.vmem [shape: f32[1,128], index: 4, kind: input, shape index: {}]
  %s5 = inlined_call_operand.vmem [shape: bf16[1,128], index: 5, kind: input, shape index: {}]
  %s6 = inlined_call_operand.<no memory space> [shape: f32[1,1], index: 6, kind: input, shape index: {}]
  %s7 = inlined_call_operand.vmem [shape: f32[128,1], index: 7, kind: output, shape index: {}]
  %s8 = sld [smem:[#allocation0]]
  $region38: #{tpu_custom_call.1} parent=0
    _
  %s10 = ssub.s32 1, %s8
  %s11 = scalar_select 0, %s10, %s8
  %v12 = vstv %s6
  %13 = vst [vmem:[#allocation2] sm:$0x1] %v12
  // Predicated region
  $region2: #{tpu_custom_call.1} parent=0 // pred_check
    _
  $region3: #{tpu_custom_call.1} parent=0 // pred_check_branch
    %15 = sbr.rel (0) target = $region5
  $region4: #{tpu_custom_call.1} parent=0 // pred_region
    _
  $region5: #{tpu_custom_call.1} parent=0 // pred_fallthru
    _
  // Predicated region
  $region6: #{tpu_custom_call.1} parent=0 // pred_check
    _
  $region7: #{tpu_custom_call.1} parent=0 // pred_check_branch
    %17 = sbr.rel (0) target = $region9
  $region8: #{tpu_custom_call.1} parent=0 // pred_region
    _
  $region9: #{tpu_custom_call.1} parent=0 // pred_fallthru
    _
  // Predicated region
  $region10: #{tpu_custom_call.1} parent=0 // pred_check
    _
  $region11: #{tpu_custom_call.1} parent=0 // pred_check_branch
    %19 = sbr.rel (0) target = $region13
  $region12: #{tpu_custom_call.1} parent=0 // pred_region
    _
  $region13: #{tpu_custom_call.1} parent=0 // pred_fallthru
    _
  // Predicated region
  $region14: #{tpu_custom_call.1} parent=0 // pred_check
    _
  $region15: #{tpu_custom_call.1} parent=0 // pred_check_branch
    %21 = sbr.rel (0) target = $region17
  $region16: #{tpu_custom_call.1} parent=0 // pred_region
    _
  $region17: #{tpu_custom_call.1} parent=0 // pred_fallthru
    _
  // Predicated region
  $region18: #{tpu_custom_call.1} parent=0 // pred_check
    _
  $region19: #{tpu_custom_call.1} parent=0 // pred_check_branch
    %23 = sbr.rel (0) target = $region21
  $region20: #{tpu_custom_call.1} parent=0 // pred_region
    _
  $region21: #{tpu_custom_call.1} parent=0 // pred_fallthru
    _
  // Predicated region
  $region22: #{tpu_custom_call.1} parent=0 // pred_check
    _
  $region23: #{tpu_custom_call.1} parent=0 // pred_check_branch
    %25 = sbr.rel (0) target = $region25
  $region24: #{tpu_custom_call.1} parent=0 // pred_region
    _
  $region25: #{tpu_custom_call.1} parent=0 // pred_fallthru
    _
  // Predicated region
  $region26: #{tpu_custom_call.1} parent=0 // pred_check
    _
  $region27: #{tpu_custom_call.1} parent=0 // pred_check_branch
    %27 = sbr.rel (0) target = $region29
  $region28: #{tpu_custom_call.1} parent=0 // pred_region
    _
  $region29: #{tpu_custom_call.1} parent=0 // pred_fallthru
    _
  %v29 = vld [vmem:[%s0] sm:$0xff]
  %v30 = vld [vmem:[%s0 + $0x8] sm:$0xff]
  %v31 = vld [vmem:[%s0 + $0x10] sm:$0xff]
  %v32 = vld [vmem:[%s0 + $0x18] sm:$0xff]
  %v33 = vld [vmem:[%s0 + $0x20] sm:$0xff]
  %v34 = vld [vmem:[%s0 + $0x28] sm:$0xff]
  %v35 = vld [vmem:[%s0 + $0x30] sm:$0xff]
  %v36 = vld [vmem:[%s0 + $0x38] sm:$0xff]
  %v37 = vld [vmem:[%s0 + $0x40] sm:$0xff]
  %v38 = vld [vmem:[%s0 + $0x48] sm:$0xff]
  %v39 = vld [vmem:[%s0 + $0x50] sm:$0xff]
  %v40 = vld [vmem:[%s0 + $0x58] sm:$0xff]
  %v41 = vld [vmem:[%s0 + $0x60] sm:$0xff]
  %v42 = vld [vmem:[%s0 + $0x68] sm:$0xff]
  %v43 = vld [vmem:[%s0 + $0x70] sm:$0xff]
  %v44 = vld [vmem:[%s0 + $0x78] sm:$0xff]
  %v45 = vpack.c.bf16 %v30, %v29
  %v46 = vpack.c.bf16 %v32, %v31
  %v47 = vpack.c.bf16 %v34, %v33
  %v48 = vpack.c.bf16 %v36, %v35
  %v49 = vpack.c.bf16 %v38, %v37
  %v50 = vpack.c.bf16 %v40, %v39
  %v51 = vpack.c.bf16 %v42, %v41
  %v52 = vpack.c.bf16 %v44, %v43
  %v53 = vld [vmem:[%s1] sm:$0xff]
  %v54 = vld [vmem:[%s1 + $0x8] sm:$0xff]
  %v55 = vld [vmem:[%s1 + $0x10] sm:$0xff]
  %v56 = vld [vmem:[%s1 + $0x18] sm:$0xff]
  %v57 = vld [vmem:[%s2] sm:$0x3]
  %v59 = vlaneseq
  %v60 = vshrl.u32 %v59, 7
  %v61 = vsub.s32 0, %v60
  %v62 = vrot.slane %v57, %v61
  %v63 = vlaneseq
  %v64 = vshrl.u32 %v63, 7
  %v65 = vsub.s32 1, %v64
  %v66 = vrot.slane %v57, %v65
  %v73 = vunpack.c.l.b16 %v53
  %v74 = vunpack.c.h.b16 %v53
  %v75 = vunpack.c.l.b16 %v54
  %v76 = vunpack.c.h.b16 %v54
  %v77 = vunpack.c.l.b16 %v55
  %v78 = vunpack.c.h.b16 %v55
  %v79 = vunpack.c.l.b16 %v56
  %v80 = vunpack.c.h.b16 %v56
  %v81 = vpack.c.b16 %v75, %v73
  %v82 = vpack.c.b16 %v76, %v74
  %v83 = vpack.c.b16 %v79, %v77
  %v84 = vpack.c.b16 %v80, %v78
  %vm89 = vcmask 261120
  %v91 = vsel %vm89, %v45, 0
  %v94 = vsel %vm89, %v46, 0
  %v97 = vsel %vm89, %v47, 0
  %v100 = vsel %vm89, %v48, 0
  %v103 = vsel %vm89, %v49, 0
  %v106 = vsel %vm89, %v50, 0
  %v109 = vsel %vm89, %v51, 0
  %v112 = vsel %vm89, %v52, 0
  %114 = vmatprep.subr.bf16.mxu0 %v82
  %115 = vmatpush1.bf16.msra.mxu0 %v81
  %116 = vmatprep.subr.bf16.mxu0 %v84
  %117 = vmatpush1.bf16.msra.mxu0 %v83
  %118 = vmatprep.subr.bf16.mxu0 0
  %119 = vmatpush1.bf16.msra.mxu0 0
  %120 = vmatprep.subr.bf16.mxu0 0
  %121 = vmatpush1.bf16.msra.mxu0 0
  %122 = vmatprep.subr.bf16.mxu0 0
  %123 = vmatpush1.bf16.msra.mxu0 0
  %124 = vmatprep.subr.bf16.mxu0 0
  %125 = vmatpush1.bf16.msra.mxu0 0
  %126 = vmatprep.subr.bf16.mxu0 0
  %127 = vmatpush1.bf16.msra.mxu0 0
  %128 = vmatprep.subr.bf16.mxu0 0
  %129 = vmatpush1.bf16.msra.mxu0 0
  %130 = vmatprep.subr.bf16.mxu0 0
  %131 = vmatpush1.bf16.msra.mxu0 0
  %132 = vmatprep.subr.bf16.mxu0 0
  %133 = vmatpush1.bf16.msra.mxu0 0
  %134 = vmatprep.subr.bf16.mxu0 0
  %135 = vmatpush1.bf16.msra.mxu0 0
  %136 = vmatprep.subr.bf16.mxu0 0
  %137 = vmatpush1.bf16.msra.mxu0 0
  %138 = vmatprep.subr.bf16.mxu0 0
  %139 = vmatpush1.bf16.msra.mxu0 0
  %140 = vmatprep.subr.bf16.mxu0 0
  %141 = vmatpush1.bf16.msra.mxu0 0
  %142 = vmatprep.subr.bf16.mxu0 0
  %143 = vmatpush1.bf16.msra.mxu0 0
  %144 = vmatprep.subr.bf16.mxu0 0
  %145 = vmatpush1.bf16.msra.mxu0 0
  %146 = vmatprep.mubr.bf16.mxu0 0
  %147 = vmatmul.mubr.bf16.gmra.mrb[0].mxu0 %v91
  %v148 = vpop.f32.mrb[0].mxu0
  %v149 = vadd.f32 %v62, %v148
  %v150 = vpop.f32.mrb[0].mxu0
  %v151 = vadd.f32 %v66, %v150
  %v152 = vpop.f32.mrb[0].mxu0
  %v153 = vadd.f32 %v62, %v152
  %v154 = vpop.f32.mrb[0].mxu0
  %v155 = vadd.f32 %v66, %v154
  %156 = vmatprep.mubr.bf16.mxu0 0
  %157 = vmatmul.mubr.bf16.gmra.mrb[0].mxu0 %v94
  %v158 = vpop.f32.mrb[0].mxu0
  %v159 = vadd.f32 %v62, %v158
  %v160 = vpop.f32.mrb[0].mxu0
  %v161 = vadd.f32 %v66, %v160
  %v162 = vpop.f32.mrb[0].mxu0
  %v163 = vadd.f32 %v62, %v162
  %v164 = vpop.f32.mrb[0].mxu0
  %v165 = vadd.f32 %v66, %v164
  %166 = vmatprep.mubr.bf16.mxu0 0
  %167 = vmatmul.mubr.bf16.gmra.mrb[0].mxu0 %v97
  %v168 = vpop.f32.mrb[0].mxu0
  %v169 = vadd.f32 %v62, %v168
  %v170 = vpop.f32.mrb[0].mxu0
  %v171 = vadd.f32 %v66, %v170
  %v172 = vpop.f32.mrb[0].mxu0
  %v173 = vadd.f32 %v62, %v172
  %v174 = vpop.f32.mrb[0].mxu0
  %v175 = vadd.f32 %v66, %v174
  %176 = vmatprep.mubr.bf16.mxu0 0
  %177 = vmatmul.mubr.bf16.gmra.mrb[0].mxu0 %v100
  %v178 = vpop.f32.mrb[0].mxu0
  %v179 = vadd.f32 %v62, %v178
  %v180 = vpop.f32.mrb[0].mxu0
  %v181 = vadd.f32 %v66, %v180
  %v182 = vpop.f32.mrb[0].mxu0
  %v183 = vadd.f32 %v62, %v182
  %v184 = vpop.f32.mrb[0].mxu0
  %v185 = vadd.f32 %v66, %v184
  %186 = vmatprep.mubr.bf16.mxu0 0
  %187 = vmatmul.mubr.bf16.gmra.mrb[0].mxu0 %v103
  %v188 = vpop.f32.mrb[0].mxu0
  %v189 = vadd.f32 %v62, %v188
  %v190 = vpop.f32.mrb[0].mxu0
  %v191 = vadd.f32 %v66, %v190
  %v192 = vpop.f32.mrb[0].mxu0
  %v193 = vadd.f32 %v62, %v192
  %v194 = vpop.f32.mrb[0].mxu0
  %v195 = vadd.f32 %v66, %v194
  %196 = vmatprep.mubr.bf16.mxu0 0
  %197 = vmatmul.mubr.bf16.gmra.mrb[0].mxu0 %v106
  %v198 = vpop.f32.mrb[0].mxu0
  %v199 = vadd.f32 %v62, %v198
  %v200 = vpop.f32.mrb[0].mxu0
  %v201 = vadd.f32 %v66, %v200
  %v202 = vpop.f32.mrb[0].mxu0
  %v203 = vadd.f32 %v62, %v202
  %v204 = vpop.f32.mrb[0].mxu0
  %v205 = vadd.f32 %v66, %v204
  %206 = vmatprep.mubr.bf16.mxu0 0
  %207 = vmatmul.mubr.bf16.gmra.mrb[0].mxu0 %v109
  %v208 = vpop.f32.mrb[0].mxu0
  %v209 = vadd.f32 %v62, %v208
  %v210 = vpop.f32.mrb[0].mxu0
  %v211 = vadd.f32 %v66, %v210
  %v212 = vpop.f32.mrb[0].mxu0
  %v213 = vadd.f32 %v62, %v212
  %v214 = vpop.f32.mrb[0].mxu0
  %v215 = vadd.f32 %v66, %v214
  %216 = vmatprep.mubr.bf16.mxu0 0
  %217 = vmatmul.mubr.bf16.gmra.mrb[0].mxu0 %v112
  %v218 = vpop.f32.mrb[0].mxu0
  %v219 = vadd.f32 %v62, %v218
  %v220 = vpop.f32.mrb[0].mxu0
  %v221 = vadd.f32 %v66, %v220
  %v222 = vpop.f32.mrb[0].mxu0
  %v223 = vadd.f32 %v62, %v222
  %v224 = vpop.f32.mrb[0].mxu0
  %v225 = vadd.f32 %v66, %v224
  %226 = vdwg.mxu0
  %v227 = vmul.f32 %v149, 0.5
  %v228 = vmul.f32 %v151, 0.5
  %v229 = vmul.f32 %v153, 0.5
  %v230 = vmul.f32 %v155, 0.5
  %v231 = vmul.f32 %v159, 0.5
  %v232 = vmul.f32 %v161, 0.5
  %v233 = vmul.f32 %v163, 0.5
  %v234 = vmul.f32 %v165, 0.5
  %v235 = vmul.f32 %v169, 0.5
  %v236 = vmul.f32 %v171, 0.5
  %v237 = vmul.f32 %v173, 0.5
  %v238 = vmul.f32 %v175, 0.5
  %v239 = vmul.f32 %v179, 0.5
  %v240 = vmul.f32 %v181, 0.5
  %v241 = vmul.f32 %v183, 0.5
  %v242 = vmul.f32 %v185, 0.5
  %v243 = vmul.f32 %v189, 0.5
  %v244 = vmul.f32 %v191, 0.5
  %v245 = vmul.f32 %v193, 0.5
  %v246 = vmul.f32 %v195, 0.5
  %v247 = vmul.f32 %v199, 0.5
  %v248 = vmul.f32 %v201, 0.5
  %v249 = vmul.f32 %v203, 0.5
  %v250 = vmul.f32 %v205, 0.5
  %v251 = vmul.f32 %v209, 0.5
  %v252 = vmul.f32 %v211, 0.5
  %v253 = vmul.f32 %v213, 0.5
  %v254 = vmul.f32 %v215, 0.5
  %v255 = vmul.f32 %v219, 0.5
  %v256 = vmul.f32 %v221, 0.5
  %v257 = vmul.f32 %v223, 0.5
  %v258 = vmul.f32 %v225, 0.5
  %v259 = vtanh.pop %v227
  %v260 = vtanh.pop %v228
  %v261 = vtanh.pop %v229
  %v262 = vtanh.pop %v230
  %v263 = vtanh.pop %v231
  %v264 = vtanh.pop %v232
  %v265 = vtanh.pop %v233
  %v266 = vtanh.pop %v234
  %v267 = vtanh.pop %v235
  %v268 = vtanh.pop %v236
  %v269 = vtanh.pop %v237
  %v270 = vtanh.pop %v238
  %v271 = vtanh.pop %v239
  %v272 = vtanh.pop %v240
  %v273 = vtanh.pop %v241
  %v274 = vtanh.pop %v242
  %v275 = vtanh.pop %v243
  %v276 = vtanh.pop %v244
  %v277 = vtanh.pop %v245
  %v278 = vtanh.pop %v246
  %v279 = vtanh.pop %v247
  %v280 = vtanh.pop %v248
  %v281 = vtanh.pop %v249
  %v282 = vtanh.pop %v250
  %v283 = vtanh.pop %v251
  %v284 = vtanh.pop %v252
  %v285 = vtanh.pop %v253
  %v286 = vtanh.pop %v254
  %v287 = vtanh.pop %v255
  %v288 = vtanh.pop %v256
  %v289 = vtanh.pop %v257
  %v290 = vtanh.pop %v258
  %v291 = vmul.f32 %v259, 0.5
  %v292 = vmul.f32 %v260, 0.5
  %v293 = vmul.f32 %v261, 0.5
  %v294 = vmul.f32 %v262, 0.5
  %v295 = vmul.f32 %v263, 0.5
  %v296 = vmul.f32 %v264, 0.5
  %v297 = vmul.f32 %v265, 0.5
  %v298 = vmul.f32 %v266, 0.5
  %v299 = vmul.f32 %v267, 0.5
  %v300 = vmul.f32 %v268, 0.5
  %v301 = vmul.f32 %v269, 0.5
  %v302 = vmul.f32 %v270, 0.5
  %v303 = vmul.f32 %v271, 0.5
  %v304 = vmul.f32 %v272, 0.5
  %v305 = vmul.f32 %v273, 0.5
  %v306 = vmul.f32 %v274, 0.5
  %v307 = vmul.f32 %v275, 0.5
  %v308 = vmul.f32 %v276, 0.5
  %v309 = vmul.f32 %v277, 0.5
  %v310 = vmul.f32 %v278, 0.5
  %v311 = vmul.f32 %v279, 0.5
  %v312 = vmul.f32 %v280, 0.5
  %v313 = vmul.f32 %v281, 0.5
  %v314 = vmul.f32 %v282, 0.5
  %v315 = vmul.f32 %v283, 0.5
  %v316 = vmul.f32 %v284, 0.5
  %v317 = vmul.f32 %v285, 0.5
  %v318 = vmul.f32 %v286, 0.5
  %v319 = vmul.f32 %v287, 0.5
  %v320 = vmul.f32 %v288, 0.5
  %v321 = vmul.f32 %v289, 0.5
  %v322 = vmul.f32 %v290, 0.5
  %v323 = vadd.f32 %v291, 0.5
  %v324 = vadd.f32 %v292, 0.5
  %v325 = vadd.f32 %v293, 0.5
  %v326 = vadd.f32 %v294, 0.5
  %v327 = vadd.f32 %v295, 0.5
  %v328 = vadd.f32 %v296, 0.5
  %v329 = vadd.f32 %v297, 0.5
  %v330 = vadd.f32 %v298, 0.5
  %v331 = vadd.f32 %v299, 0.5
  %v332 = vadd.f32 %v300, 0.5
  %v333 = vadd.f32 %v301, 0.5
  %v334 = vadd.f32 %v302, 0.5
  %v335 = vadd.f32 %v303, 0.5
  %v336 = vadd.f32 %v304, 0.5
  %v337 = vadd.f32 %v305, 0.5
  %v338 = vadd.f32 %v306, 0.5
  %v339 = vadd.f32 %v307, 0.5
  %v340 = vadd.f32 %v308, 0.5
  %v341 = vadd.f32 %v309, 0.5
  %v342 = vadd.f32 %v310, 0.5
  %v343 = vadd.f32 %v311, 0.5
  %v344 = vadd.f32 %v312, 0.5
  %v345 = vadd.f32 %v313, 0.5
  %v346 = vadd.f32 %v314, 0.5
  %v347 = vadd.f32 %v315, 0.5
  %v348 = vadd.f32 %v316, 0.5
  %v349 = vadd.f32 %v317, 0.5
  %v350 = vadd.f32 %v318, 0.5
  %v351 = vadd.f32 %v319, 0.5
  %v352 = vadd.f32 %v320, 0.5
  %v353 = vadd.f32 %v321, 0.5
  %v354 = vadd.f32 %v322, 0.5
  %v355 = vpack.c.bf16 %v325, %v323
  %v356 = vpack.c.bf16 %v326, %v324
  %v357 = vpack.c.bf16 %v329, %v327
  %v358 = vpack.c.bf16 %v330, %v328
  %v359 = vpack.c.bf16 %v333, %v331
  %v360 = vpack.c.bf16 %v334, %v332
  %v361 = vpack.c.bf16 %v337, %v335
  %v362 = vpack.c.bf16 %v338, %v336
  %v363 = vpack.c.bf16 %v341, %v339
  %v364 = vpack.c.bf16 %v342, %v340
  %v365 = vpack.c.bf16 %v345, %v343
  %v366 = vpack.c.bf16 %v346, %v344
  %v367 = vpack.c.bf16 %v349, %v347
  %v368 = vpack.c.bf16 %v350, %v348
  %v369 = vpack.c.bf16 %v353, %v351
  %v370 = vpack.c.bf16 %v354, %v352
  %v371 = vld [vmem:[%s3] sm:$0xf]
  %v372 = vld [vmem:[%s3 + $0x4] sm:$0xf]
  %v373 = vld [vmem:[%s3 + $0x8] sm:$0xf]
  %v374 = vld [vmem:[%s3 + $0xc] sm:$0xf]
  %v375 = vld [vmem:[%s3 + $0x10] sm:$0xf]
  %v376 = vld [vmem:[%s3 + $0x14] sm:$0xf]
  %v377 = vld [vmem:[%s3 + $0x18] sm:$0xf]
  %v378 = vld [vmem:[%s3 + $0x1c] sm:$0xf]
  %v379 = vld [vmem:[%s3 + $0x20] sm:$0xf]
  %v380 = vld [vmem:[%s3 + $0x24] sm:$0xf]
  %v381 = vld [vmem:[%s3 + $0x28] sm:$0xf]
  %v382 = vld [vmem:[%s3 + $0x2c] sm:$0xf]
  %v383 = vld [vmem:[%s3 + $0x30] sm:$0xf]
  %v384 = vld [vmem:[%s3 + $0x34] sm:$0xf]
  %v385 = vld [vmem:[%s3 + $0x38] sm:$0xf]
  %v386 = vld [vmem:[%s3 + $0x3c] sm:$0xf]
  %v387 = vld [vmem:[%s3 + $0x40] sm:$0xf]
  %v388 = vld [vmem:[%s3 + $0x44] sm:$0xf]
  %v389 = vld [vmem:[%s3 + $0x48] sm:$0xf]
  %v390 = vld [vmem:[%s3 + $0x4c] sm:$0xf]
  %v391 = vld [vmem:[%s3 + $0x50] sm:$0xf]
  %v392 = vld [vmem:[%s3 + $0x54] sm:$0xf]
  %v393 = vld [vmem:[%s3 + $0x58] sm:$0xf]
  %v394 = vld [vmem:[%s3 + $0x5c] sm:$0xf]
  %v395 = vld [vmem:[%s3 + $0x60] sm:$0xf]
  %v396 = vld [vmem:[%s3 + $0x64] sm:$0xf]
  %v397 = vld [vmem:[%s3 + $0x68] sm:$0xf]
  %v398 = vld [vmem:[%s3 + $0x6c] sm:$0xf]
  %v399 = vld [vmem:[%s3 + $0x70] sm:$0xf]
  %v400 = vld [vmem:[%s3 + $0x74] sm:$0xf]
  %v401 = vld [vmem:[%s3 + $0x78] sm:$0xf]
  %v402 = vld [vmem:[%s3 + $0x7c] sm:$0xf]
  %v403 = vld [vmem:[%s4] sm:$0x1]
  %v405 = vlaneseq
  %v406 = vshrl.u32 %v405, 7
  %v407 = vsub.s32 0, %v406
  %v408 = vrot.slane %v403, %v407
  %v442 = vunpack.c.l.b16 %v371
  %v443 = vunpack.c.l.b16 %v372
  %v444 = vunpack.c.l.b16 %v373
  %v445 = vunpack.c.l.b16 %v374
  %v446 = vunpack.c.l.b16 %v375
  %v447 = vunpack.c.l.b16 %v376
  %v448 = vunpack.c.l.b16 %v377
  %v449 = vunpack.c.l.b16 %v378
  %v450 = vunpack.c.l.b16 %v379
  %v451 = vunpack.c.l.b16 %v380
  %v452 = vunpack.c.l.b16 %v381
  %v453 = vunpack.c.l.b16 %v382
  %v454 = vunpack.c.l.b16 %v383
  %v455 = vunpack.c.l.b16 %v384
  %v456 = vunpack.c.l.b16 %v385
  %v457 = vunpack.c.l.b16 %v386
  %v458 = vunpack.c.l.b16 %v387
  %v459 = vunpack.c.l.b16 %v388
  %v460 = vunpack.c.l.b16 %v389
  %v461 = vunpack.c.l.b16 %v390
  %v462 = vunpack.c.l.b16 %v391
  %v463 = vunpack.c.l.b16 %v392
  %v464 = vunpack.c.l.b16 %v393
  %v465 = vunpack.c.l.b16 %v394
  %v466 = vunpack.c.l.b16 %v395
  %v467 = vunpack.c.l.b16 %v396
  %v468 = vunpack.c.l.b16 %v397
  %v469 = vunpack.c.l.b16 %v398
  %v470 = vunpack.c.l.b16 %v399
  %v471 = vunpack.c.l.b16 %v400
  %v472 = vunpack.c.l.b16 %v401
  %v473 = vunpack.c.l.b16 %v402
  %v474 = vpack.c.b16 %v443, %v442
  %v475 = vpack.c.b16 %v445, %v444
  %v476 = vpack.c.b16 %v447, %v446
  %v477 = vpack.c.b16 %v449, %v448
  %v478 = vpack.c.b16 %v451, %v450
  %v479 = vpack.c.b16 %v453, %v452
  %v480 = vpack.c.b16 %v455, %v454
  %v481 = vpack.c.b16 %v457, %v456
  %v482 = vpack.c.b16 %v459, %v458
  %v483 = vpack.c.b16 %v461, %v460
  %v484 = vpack.c.b16 %v463, %v462
  %v485 = vpack.c.b16 %v465, %v464
  %v486 = vpack.c.b16 %v467, %v466
  %v487 = vpack.c.b16 %v469, %v468
  %v488 = vpack.c.b16 %v471, %v470
  %v489 = vpack.c.b16 %v473, %v472
  %506 = vmatprep.subr.bf16.mxu0 0
  %507 = vmatpush1.bf16.msra.mxu0 %v474
  %508 = vmatprep.subr.bf16.mxu0 0
  %509 = vmatpush1.bf16.msra.mxu0 %v475
  %510 = vmatprep.subr.bf16.mxu0 0
  %511 = vmatpush1.bf16.msra.mxu0 %v476
  %512 = vmatprep.subr.bf16.mxu0 0
  %513 = vmatpush1.bf16.msra.mxu0 %v477
  %514 = vmatprep.subr.bf16.mxu0 0
  %515 = vmatpush1.bf16.msra.mxu0 %v478
  %516 = vmatprep.subr.bf16.mxu0 0
  %517 = vmatpush1.bf16.msra.mxu0 %v479
  %518 = vmatprep.subr.bf16.mxu0 0
  %519 = vmatpush1.bf16.msra.mxu0 %v480
  %520 = vmatprep.subr.bf16.mxu0 0
  %521 = vmatpush1.bf16.msra.mxu0 %v481
  %522 = vmatprep.subr.bf16.mxu0 0
  %523 = vmatpush1.bf16.msra.mxu0 %v482
  %524 = vmatprep.subr.bf16.mxu0 0
  %525 = vmatpush1.bf16.msra.mxu0 %v483
  %526 = vmatprep.subr.bf16.mxu0 0
  %527 = vmatpush1.bf16.msra.mxu0 %v484
  %528 = vmatprep.subr.bf16.mxu0 0
  %529 = vmatpush1.bf16.msra.mxu0 %v485
  %530 = vmatprep.subr.bf16.mxu0 0
  %531 = vmatpush1.bf16.msra.mxu0 %v486
  %532 = vmatprep.subr.bf16.mxu0 0
  %533 = vmatpush1.bf16.msra.mxu0 %v487
  %534 = vmatprep.subr.bf16.mxu0 0
  %535 = vmatpush1.bf16.msra.mxu0 %v488
  %536 = vmatprep.subr.bf16.mxu0 0
  %537 = vmatpush1.bf16.msra.mxu0 %v489
  %538 = vmatprep.mubr.bf16.mxu0 %v356
  %539 = vmatmul.mubr.bf16.gmra.mrb[0].mxu0 %v355
  %v540 = vpop.f32.mrb[0].mxu0
  %v541 = vadd.f32 %v408, %v540
  %v542 = vpop.f32.mrb[0].mxu0
  %v543 = vpop.f32.mrb[0].mxu0
  %v544 = vadd.f32 %v408, %v543
  %v545 = vpop.f32.mrb[0].mxu0
  %546 = vmatprep.mubr.bf16.mxu0 %v358
  %547 = vmatmul.mubr.bf16.gmra.mrb[0].mxu0 %v357
  %v548 = vpop.f32.mrb[0].mxu0
  %v549 = vadd.f32 %v408, %v548
  %v550 = vpop.f32.mrb[0].mxu0
  %v551 = vpop.f32.mrb[0].mxu0
  %v552 = vadd.f32 %v408, %v551
  %v553 = vpop.f32.mrb[0].mxu0
  %554 = vmatprep.mubr.bf16.mxu0 %v360
  %555 = vmatmul.mubr.bf16.gmra.mrb[0].mxu0 %v359
  %v556 = vpop.f32.mrb[0].mxu0
  %v557 = vadd.f32 %v408, %v556
  %v558 = vpop.f32.mrb[0].mxu0
  %v559 = vpop.f32.mrb[0].mxu0
  %v560 = vadd.f32 %v408, %v559
  %v561 = vpop.f32.mrb[0].mxu0
  %562 = vmatprep.mubr.bf16.mxu0 %v362
  %563 = vmatmul.mubr.bf16.gmra.mrb[0].mxu0 %v361
  %v564 = vpop.f32.mrb[0].mxu0
  %v565 = vadd.f32 %v408, %v564
  %v566 = vpop.f32.mrb[0].mxu0
  %v567 = vpop.f32.mrb[0].mxu0
  %v568 = vadd.f32 %v408, %v567
  %v569 = vpop.f32.mrb[0].mxu0
  %570 = vmatprep.mubr.bf16.mxu0 %v364
  %571 = vmatmul.mubr.bf16.gmra.mrb[0].mxu0 %v363
  %v572 = vpop.f32.mrb[0].mxu0
  %v573 = vadd.f32 %v408, %v572
  %v574 = vpop.f32.mrb[0].mxu0
  %v575 = vpop.f32.mrb[0].mxu0
  %v576 = vadd.f32 %v408, %v575
  %v577 = vpop.f32.mrb[0].mxu0
  %578 = vmatprep.mubr.bf16.mxu0 %v366
  %579 = vmatmul.mubr.bf16.gmra.mrb[0].mxu0 %v365
  %v580 = vpop.f32.mrb[0].mxu0
  %v581 = vadd.f32 %v408, %v580
  %v582 = vpop.f32.mrb[0].mxu0
  %v583 = vpop.f32.mrb[0].mxu0
  %v584 = vadd.f32 %v408, %v583
  %v585 = vpop.f32.mrb[0].mxu0
  %586 = vmatprep.mubr.bf16.mxu0 %v368
  %587 = vmatmul.mubr.bf16.gmra.mrb[0].mxu0 %v367
  %v588 = vpop.f32.mrb[0].mxu0
  %v589 = vadd.f32 %v408, %v588
  %v590 = vpop.f32.mrb[0].mxu0
  %v591 = vpop.f32.mrb[0].mxu0
  %v592 = vadd.f32 %v408, %v591
  %v593 = vpop.f32.mrb[0].mxu0
  %594 = vmatprep.mubr.bf16.mxu0 %v370
  %595 = vmatmul.mubr.bf16.gmra.mrb[0].mxu0 %v369
  %v596 = vpop.f32.mrb[0].mxu0
  %v597 = vadd.f32 %v408, %v596
  %v598 = vpop.f32.mrb[0].mxu0
  %v599 = vpop.f32.mrb[0].mxu0
  %v600 = vadd.f32 %v408, %v599
  %v601 = vpop.f32.mrb[0].mxu0
  %602 = vdwg.mxu0
  %v603 = vmul.f32 %v541, 0.5
  %v604 = vmul.f32 %v544, 0.5
  %v605 = vmul.f32 %v549, 0.5
  %v606 = vmul.f32 %v552, 0.5
  %v607 = vmul.f32 %v557, 0.5
  %v608 = vmul.f32 %v560, 0.5
  %v609 = vmul.f32 %v565, 0.5
  %v610 = vmul.f32 %v568, 0.5
  %v611 = vmul.f32 %v573, 0.5
  %v612 = vmul.f32 %v576, 0.5
  %v613 = vmul.f32 %v581, 0.5
  %v614 = vmul.f32 %v584, 0.5
  %v615 = vmul.f32 %v589, 0.5
  %v616 = vmul.f32 %v592, 0.5
  %v617 = vmul.f32 %v597, 0.5
  %v618 = vmul.f32 %v600, 0.5
  %v619 = vtanh.pop %v603
  %v620 = vtanh.pop %v604
  %v621 = vtanh.pop %v605
  %v622 = vtanh.pop %v606
  %v623 = vtanh.pop %v607
  %v624 = vtanh.pop %v608
  %v625 = vtanh.pop %v609
  %v626 = vtanh.pop %v610
  %v627 = vtanh.pop %v611
  %v628 = vtanh.pop %v612
  %v629 = vtanh.pop %v613
  %v630 = vtanh.pop %v614
  %v631 = vtanh.pop %v615
  %v632 = vtanh.pop %v616
  %v633 = vtanh.pop %v617
  %v634 = vtanh.pop %v618
  %v635 = vmul.f32 %v619, 0.5
  %v636 = vmul.f32 %v620, 0.5
  %v637 = vmul.f32 %v621, 0.5
  %v638 = vmul.f32 %v622, 0.5
  %v639 = vmul.f32 %v623, 0.5
  %v640 = vmul.f32 %v624, 0.5
  %v641 = vmul.f32 %v625, 0.5
  %v642 = vmul.f32 %v626, 0.5
  %v643 = vmul.f32 %v627, 0.5
  %v644 = vmul.f32 %v628, 0.5
  %v645 = vmul.f32 %v629, 0.5
  %v646 = vmul.f32 %v630, 0.5
  %v647 = vmul.f32 %v631, 0.5
  %v648 = vmul.f32 %v632, 0.5
  %v649 = vmul.f32 %v633, 0.5
  %v650 = vmul.f32 %v634, 0.5
  %v651 = vadd.f32 %v635, 0.5
  %v652 = vadd.f32 %v636, 0.5
  %v653 = vadd.f32 %v637, 0.5
  %v654 = vadd.f32 %v638, 0.5
  %v655 = vadd.f32 %v639, 0.5
  %v656 = vadd.f32 %v640, 0.5
  %v657 = vadd.f32 %v641, 0.5
  %v658 = vadd.f32 %v642, 0.5
  %v659 = vadd.f32 %v643, 0.5
  %v660 = vadd.f32 %v644, 0.5
  %v661 = vadd.f32 %v645, 0.5
  %v662 = vadd.f32 %v646, 0.5
  %v663 = vadd.f32 %v647, 0.5
  %v664 = vadd.f32 %v648, 0.5
  %v665 = vadd.f32 %v649, 0.5
  %v666 = vadd.f32 %v650, 0.5
  %v667 = vld [vmem:[%s5] sm:$0x1]
  %v668 = vunpack.c.l.bf16 %v667
  %v669 = vlaneseq
  %v670 = vshrl.u32 %v669, 7
  %v671 = vsub.s32 0, %v670
  %v672 = vrot.slane %v668, %v671
  %v673 = vmul.f32 %v651, %v672
  %v674 = vmul.f32 %v652, %v672
  %v675 = vmul.f32 %v653, %v672
  %v676 = vmul.f32 %v654, %v672
  %v677 = vmul.f32 %v655, %v672
  %v678 = vmul.f32 %v656, %v672
  %v679 = vmul.f32 %v657, %v672
  %v680 = vmul.f32 %v658, %v672
  %v681 = vmul.f32 %v659, %v672
  %v682 = vmul.f32 %v660, %v672
  %v683 = vmul.f32 %v661, %v672
  %v684 = vmul.f32 %v662, %v672
  %v685 = vmul.f32 %v663, %v672
  %v686 = vmul.f32 %v664, %v672
  %v687 = vmul.f32 %v665, %v672
  %v688 = vmul.f32 %v666, %v672
  %689 = vadd.xlane.f32.xlu0 %v673
  %v690 = vpop.xlane.xlu0 %689
  %691 = vadd.xlane.f32.xlu0 %v674
  %v692 = vpop.xlane.xlu0 %691
  %693 = vadd.xlane.f32.xlu0 %v675
  %v694 = vpop.xlane.xlu0 %693
  %695 = vadd.xlane.f32.xlu0 %v676
  %v696 = vpop.xlane.xlu0 %695
  %697 = vadd.xlane.f32.xlu0 %v677
  %v698 = vpop.xlane.xlu0 %697
  %699 = vadd.xlane.f32.xlu0 %v678
  %v700 = vpop.xlane.xlu0 %699
  %701 = vadd.xlane.f32.xlu0 %v679
  %v702 = vpop.xlane.xlu0 %701
  %703 = vadd.xlane.f32.xlu0 %v680
  %v704 = vpop.xlane.xlu0 %703
  %705 = vadd.xlane.f32.xlu0 %v681
  %v706 = vpop.xlane.xlu0 %705
  %707 = vadd.xlane.f32.xlu0 %v682
  %v708 = vpop.xlane.xlu0 %707
  %709 = vadd.xlane.f32.xlu0 %v683
  %v710 = vpop.xlane.xlu0 %709
  %711 = vadd.xlane.f32.xlu0 %v684
  %v712 = vpop.xlane.xlu0 %711
  %713 = vadd.xlane.f32.xlu0 %v685
  %v714 = vpop.xlane.xlu0 %713
  %715 = vadd.xlane.f32.xlu0 %v686
  %v716 = vpop.xlane.xlu0 %715
  %717 = vadd.xlane.f32.xlu0 %v687
  %v718 = vpop.xlane.xlu0 %717
  %719 = vadd.xlane.f32.xlu0 %v688
  %v720 = vpop.xlane.xlu0 %719
  %v721 = vld [vmem:[#allocation2] sm:$0x1]
  %v723 = vlaneseq
  %v724 = vshrl.u32 %v723, 7
  %v725 = vsub.s32 0, %v724
  %v726 = vrot.slane %v721, %v725
  %v728 = vadd.f32 %v690, %v726
  %v729 = vadd.f32 %v692, %v726
  %v730 = vadd.f32 %v694, %v726
  %v731 = vadd.f32 %v696, %v726
  %v732 = vadd.f32 %v698, %v726
  %v733 = vadd.f32 %v700, %v726
  %v734 = vadd.f32 %v702, %v726
  %v735 = vadd.f32 %v704, %v726
  %v736 = vadd.f32 %v706, %v726
  %v737 = vadd.f32 %v708, %v726
  %v738 = vadd.f32 %v710, %v726
  %v739 = vadd.f32 %v712, %v726
  %v740 = vadd.f32 %v714, %v726
  %v741 = vadd.f32 %v716, %v726
  %v742 = vadd.f32 %v718, %v726
  %v743 = vadd.f32 %v720, %v726
  %vm744 = vcmask 7168
  %745 = vst.msk [vmem:[%s7] sm:$0xff] %vm744, %v728
  %746 = vst.msk [vmem:[%s7 + $0x8] sm:$0xff] %vm744, %v729
  %747 = vst.msk [vmem:[%s7 + $0x10] sm:$0xff] %vm744, %v730
  %748 = vst.msk [vmem:[%s7 + $0x18] sm:$0xff] %vm744, %v731
  %749 = vst.msk [vmem:[%s7 + $0x20] sm:$0xff] %vm744, %v732
  %750 = vst.msk [vmem:[%s7 + $0x28] sm:$0xff] %vm744, %v733
  %751 = vst.msk [vmem:[%s7 + $0x30] sm:$0xff] %vm744, %v734
  %752 = vst.msk [vmem:[%s7 + $0x38] sm:$0xff] %vm744, %v735
  %753 = vst.msk [vmem:[%s7 + $0x40] sm:$0xff] %vm744, %v736
  %754 = vst.msk [vmem:[%s7 + $0x48] sm:$0xff] %vm744, %v737
  %755 = vst.msk [vmem:[%s7 + $0x50] sm:$0xff] %vm744, %v738
  %756 = vst.msk [vmem:[%s7 + $0x58] sm:$0xff] %vm744, %v739
  %757 = vst.msk [vmem:[%s7 + $0x60] sm:$0xff] %vm744, %v740
  %758 = vst.msk [vmem:[%s7 + $0x68] sm:$0xff] %vm744, %v741
  %759 = vst.msk [vmem:[%s7 + $0x70] sm:$0xff] %vm744, %v742
  %760 = vst.msk [vmem:[%s7 + $0x78] sm:$0xff] %vm744, %v743
  // Predicated region
  $region30: #{tpu_custom_call.1} parent=0 // pred_check
    _
  $region31: #{tpu_custom_call.1} parent=0 // pred_check_branch
    %762 = sbr.rel (0) target = $region33
  $region32: #{tpu_custom_call.1} parent=0 // pred_region
    _
  $region33: #{tpu_custom_call.1} parent=0 // pred_fallthru
    _
  // Predicated region
  $region34: #{tpu_custom_call.1} parent=0 // pred_check
    _
  $region35: #{tpu_custom_call.1} parent=0 // pred_check_branch
    %764 = sbr.rel (0) target = $region37
  $region36: #{tpu_custom_call.1} parent=0 // pred_region
    _
  $region37: #{tpu_custom_call.1} parent=0 // pred_fallthru
    _

</llo_original>
